<compile_context>
chip_gen: v7x
topology: tpu7x:2x2x1
jax: 0.10.0
libtpu: 0.0.40
codegen_flags: <defaults>
</compile_context>

<pallas_src>
import jax
import jax.numpy as jnp
from jax.experimental import pallas as pl
from jax.experimental.pallas import tpu as pltpu

ALPHA = 0.2          # LeakyReLU negative slope
EPS = 9e-15          # denominator epsilon from the reference code


def _leaky(x, alpha=ALPHA):
    return jnp.where(x >= 0, x, alpha * x)


# ---------------------------------------------------------------------------
# Pallas kernel: full 3-layer attention stack for one graph, all batches
# ---------------------------------------------------------------------------
def gat_graph_kernel(x_ref, mask_ref,
                     wr0_ref, bwr0_ref, a0_ref, ba0_ref,
                     wr1_ref, bwr1_ref, a1_ref, ba1_ref,
                     wr2_ref, bwr2_ref, a2_ref, ba2_ref,
                     out_ref):
    # x_ref    : (B*N, Din)      flattened node features (same for every graph)
    # mask_ref : (N, N)          adjacency mask (A > 0), float32 {0,1}
    # wr*_ref  : (Din_i, 2*D_i)  [W | R] fused weight          (per layer)
    # bwr*_ref : (1, 2*D_i)      [bW | bR] fused bias
    # a*_ref   : (D_i, 2)        [a1 | a2] fused attention vectors
    # ba*_ref  : (1, 2)          [ab, 0]  attention bias folded into column 0
    # out_ref  : (B*N, Dout)     final layer output for this graph
    n_nodes = mask_ref.shape[0]
    n_batch = x_ref.shape[0] // n_nodes
    mask = mask_ref[...] > 0.0                                   # (N, N) bool

    def layer(h, wr_ref, bwr_ref, a_ref, ba_ref):
        wr = wr_ref[...]
        dout = wr.shape[1] // 2
        # One wide MXU matmul: [Wh_pre | res] = h @ [W | R] + [bW | bR]
        whr = jnp.dot(h, wr, preferred_element_type=jnp.float32) + bwr_ref[...]
        wh = _leaky(whr[:, :dout])                               # (B*N, D)
        res = whr[:, dout:]                                      # (B*N, D)
        # Edge-score projections as a single MXU matmul:
        #   s[:, 0] = wh . a1 + ab ,  s[:, 1] = wh . a2
        s = jnp.dot(wh, a_ref[...],
                    preferred_element_type=jnp.float32) + ba_ref[...]

        pieces = []
        for b in range(n_batch):                                 # static tiny loop
            lo = b * n_nodes
            wh_b = wh[lo:lo + n_nodes, :]                        # (N, D)
            s1 = s[lo:lo + n_nodes, 0:1]                         # (N, 1)
            s2 = s[lo:lo + n_nodes, 1:2]                         # (N, 1)
            e = s1 + jnp.transpose(s2)                           # (N, N)
            att = jnp.where(mask, jnp.exp(-_leaky(e)), 0.0)      # masked scores
            rowsum = jnp.sum(att, axis=-1, keepdims=True)        # (N, 1)
            inv = pl.reciprocal(rowsum + EPS, approx=False)      # exact (EPS tiny)
            hp = jnp.dot(att, wh_b,
                         preferred_element_type=jnp.float32) * inv
            pieces.append(_leaky(hp + res[lo:lo + n_nodes, :]))
        return jnp.concatenate(pieces, axis=0)                   # (B*N, D)

    h = x_ref[...]
    h = layer(h, wr0_ref, bwr0_ref, a0_ref, ba0_ref)
    h = layer(h, wr1_ref, bwr1_ref, a1_ref, ba1_ref)
    h = layer(h, wr2_ref, bwr2_ref, a2_ref, ba2_ref)
    out_ref[...] = h


# ---------------------------------------------------------------------------
# Parameter init (deterministic, mirrors nn.Linear shapes)
# ---------------------------------------------------------------------------
def init_linear(key, din, dout):
    k1, k2 = jax.random.split(key)
    bound = 1.0 / jnp.sqrt(jnp.float32(din))
    W = jax.random.uniform(k1, (din, dout), jnp.float32, -bound, bound)
    b = jax.random.uniform(k2, (1, dout), jnp.float32, -bound, bound)
    return W, b


def init_attn_params(key, din, dout):
    kW, kR, kA = jax.random.split(key, 3)
    W, bW = init_linear(kW, din, dout)
    R, bR = init_linear(kR, din, dout)
    Afull, ab = init_linear(kA, 2 * dout, 1)        # a: Linear(2*Dout, 1)
    a1 = Afull[:dout, 0].reshape(1, dout)
    a2 = Afull[dout:, 0].reshape(1, dout)
    return dict(W=W, bW=bW, R=R, bR=bR, a1=a1, a2=a2, ab=ab)


def init_gat_params(key, in_dim, hid_dim, out_dim, n_layers=3, n_graphs=3):
    params = []
    for k in range(n_graphs):
        layers = []
        for i in range(n_layers):
            key, sub = jax.random.split(key)
            if i == 0:
                layers.append(init_attn_params(sub, in_dim, hid_dim))
            elif i == n_layers - 1:
                layers.append(init_attn_params(sub, hid_dim, out_dim))
            else:
                layers.append(init_attn_params(sub, hid_dim, hid_dim))
        params.append(layers)
    return params


def pack_gat_params(params):
    """Per-layer stacked/fused weights over graphs: WR, bWR, A(a1|a2), bA(ab|0)."""
    n_graphs = len(params)
    n_layers = len(params[0])
    packed = []
    for i in range(n_layers):
        wr = jnp.stack([jnp.concatenate([params[k][i]["W"], params[k][i]["R"]],
                                        axis=1) for k in range(n_graphs)], axis=0)
        bwr = jnp.stack([jnp.concatenate([params[k][i]["bW"], params[k][i]["bR"]],
                                         axis=1) for k in range(n_graphs)], axis=0)
        a = jnp.stack([jnp.concatenate([params[k][i]["a1"].T, params[k][i]["a2"].T],
                                       axis=1) for k in range(n_graphs)], axis=0)
        ba = jnp.stack([jnp.concatenate([params[k][i]["ab"],
                                         jnp.zeros_like(params[k][i]["ab"])],
                                        axis=1) for k in range(n_graphs)], axis=0)
        packed.append((wr, bwr, a, ba))
    return packed


# ---------------------------------------------------------------------------
# GAT forward: single fused pallas_call (grid over graphs), glue in plain JAX
# ---------------------------------------------------------------------------
def gat_forward(X, params, masks, ylength):
    # X: (B, T, N, F)  ->  H0: (B*N, T*F)
    B, T, N, F = X.shape
    n_graphs = len(masks)
    H0 = jnp.transpose(X, (0, 2, 1, 3)).reshape(B, N, T * F).reshape(B * N, T * F)
    din = H0.shape[-1]

    masks_s = jnp.stack(masks, axis=0)                       # (G, N, N)
    (wr0, bwr0, a0, ba0), (wr1, bwr1, a1, ba1), (wr2, bwr2, a2, ba2) = \
        pack_gat_params(params)
    out_dim = wr2.shape[-1] // 2

    def gspec(arr):
        return pl.BlockSpec((None,) + arr.shape[1:], lambda g: (g, 0, 0))

    weight_args = [wr0, bwr0, a0, ba0, wr1, bwr1, a1, ba1, wr2, bwr2, a2, ba2]

    per_graph = pl.pallas_call(
        gat_graph_kernel,
        out_shape=jax.ShapeDtypeStruct((n_graphs, B * N, out_dim), jnp.float32),
        grid=(n_graphs,),
        in_specs=[pl.BlockSpec((B * N, din), lambda g: (0, 0)),     # H0
                  gspec(masks_s)] + [gspec(w) for w in weight_args],
        out_specs=pl.BlockSpec((None, B * N, out_dim), lambda g: (g, 0, 0)),
        compiler_params=pltpu.CompilerParams(
            dimension_semantics=("parallel",)),
    )(H0, masks_s, *weight_args)

    # Sum over graphs (linear, so equivalent to summing after reshape/permute).
    H = jnp.sum(per_graph, axis=0)                              # (B*N, out_dim)
    H = H.reshape(B, N, ylength, out_dim // ylength)
    return jnp.transpose(H, (0, 2, 1, 3))                       # (B, ylength, N, out/ylength)


# ---------------------------------------------------------------------------
# Pure-JAX reference (for correctness check)
# ---------------------------------------------------------------------------
def attn_ref(X, mask, p):
    wh = _leaky(X @ p["W"] + p["bW"])
    res = X @ p["R"] + p["bR"]
    s1 = jnp.sum(wh * p["a1"], axis=-1, keepdims=True)
    s2 = jnp.sum(wh * p["a2"], axis=-1, keepdims=True)
    e = s1 + jnp.swapaxes(s2, 1, 2) + p["ab"][0, 0]
    att = mask[None, :, :] * jnp.exp(-_leaky(e))
    rowsum = jnp.sum(att, axis=-1, keepdims=True)
    hp = jnp.einsum('bij,bjd->bid', att, wh) / (rowsum + EPS)
    return _leaky(hp + res)


def gat_ref(X, params, masks, ylength):
    B, T, N, F = X.shape
    H0 = jnp.transpose(X, (0, 2, 1, 3)).reshape(B, N, T * F)
    outs = []
    for k in range(len(masks)):
        H = H0
        for layer_p in params[k]:
            H = attn_ref(H, masks[k], layer_p)
        Dout = H.shape[-1]
        H = jnp.transpose(H.reshape(B, N, ylength, Dout // ylength), (0, 2, 1, 3))
        outs.append(H)
    return outs[0] + outs[1] + outs[2]


# ---------------------------------------------------------------------------
if __name__ == "__main__":
    # Small shapes: B=2, T=4 time steps, N=16 nodes, F=4 features per step.
    B, T, N, F = 2, 4, 16, 4
    in_dim = T * F          # flattened per-node input dim = 16
    hid_dim = 32
    ylength = 4
    out_dim = 8             # must be divisible by ylength
    n_layers = 3

    key = jax.random.PRNGKey(0)
    kx, keuc, kroad, kpoi, kp = jax.random.split(key, 5)

    X = jax.random.normal(kx, (B, T, N, F), jnp.float32)

    # Adjacency matrices -> (A > 0).float() masks, as in GAT.__init__
    euc = jax.random.normal(keuc, (N, N), jnp.float32)
    road = jax.random.normal(kroad, (N, N), jnp.float32)
    poi = jax.random.normal(kpoi, (N, N), jnp.float32)
    masks = [(euc > 0).astype(jnp.float32),
             (road > 0).astype(jnp.float32),
             (poi > 0).astype(jnp.float32)]

    params = init_gat_params(kp, in_dim, hid_dim, out_dim, n_layers=n_layers)

    fwd = jax.jit(gat_forward, static_argnums=(3,))
    out = jax.block_until_ready(fwd(X, params, masks, ylength))

    ref = jax.block_until_ready(gat_ref(X, params, masks, ylength))
    assert out.shape == (B, ylength, N, out_dim // ylength), out.shape
    assert jnp.allclose(out, ref, atol=1e-4, rtol=1e-4), \
        float(jnp.max(jnp.abs(out - ref)))

    print("KERNEL_OK")
</pallas_src>

<mosaic_0001>
module attributes {stable_mosaic.version = 11 : i64} {
  func.func @gat_graph_kernel(%arg0: i32, %arg1: memref<32x16xf32, #tpu.memory_space<vmem>>, %arg2: memref<1x16x16xf32, #tpu.memory_space<vmem>>, %arg3: memref<1x16x64xf32, #tpu.memory_space<vmem>>, %arg4: memref<1x1x64xf32, #tpu.memory_space<vmem>>, %arg5: memref<1x32x2xf32, #tpu.memory_space<vmem>>, %arg6: memref<1x1x2xf32, #tpu.memory_space<vmem>>, %arg7: memref<1x32x64xf32, #tpu.memory_space<vmem>>, %arg8: memref<1x1x64xf32, #tpu.memory_space<vmem>>, %arg9: memref<1x32x2xf32, #tpu.memory_space<vmem>>, %arg10: memref<1x1x2xf32, #tpu.memory_space<vmem>>, %arg11: memref<1x32x16xf32, #tpu.memory_space<vmem>>, %arg12: memref<1x1x16xf32, #tpu.memory_space<vmem>>, %arg13: memref<1x8x2xf32, #tpu.memory_space<vmem>>, %arg14: memref<1x1x2xf32, #tpu.memory_space<vmem>>, %arg15: memref<1x32x8xf32, #tpu.memory_space<vmem>>) attributes {dimension_semantics = [#tpu.dimension_semantics<parallel>], iteration_bounds = array<i64: 3>, scalar_prefetch = 0 : i64, scratch_operands = 0 : i64, tpu.core_type = #tpu.core_type<tc>, window_params = [{pipeline_mode = #tpu.pipeline_mode<synchronous>, transform_indices = @transform_0, window_bounds = array<i64: 32, 16>}, {transform_indices = @transform_1, window_bounds = array<i64: 1, 16, 16>}, {transform_indices = @transform_2, window_bounds = array<i64: 1, 16, 64>}, {transform_indices = @transform_3, window_bounds = array<i64: 1, 1, 64>}, {transform_indices = @transform_4, window_bounds = array<i64: 1, 32, 2>}, {transform_indices = @transform_5, window_bounds = array<i64: 1, 1, 2>}, {transform_indices = @transform_6, window_bounds = array<i64: 1, 32, 64>}, {transform_indices = @transform_7, window_bounds = array<i64: 1, 1, 64>}, {transform_indices = @transform_8, window_bounds = array<i64: 1, 32, 2>}, {transform_indices = @transform_9, window_bounds = array<i64: 1, 1, 2>}, {transform_indices = @transform_10, window_bounds = array<i64: 1, 32, 16>}, {transform_indices = @transform_11, window_bounds = array<i64: 1, 1, 16>}, {transform_indices = @transform_12, window_bounds = array<i64: 1, 8, 2>}, {transform_indices = @transform_13, window_bounds = array<i64: 1, 1, 2>}, {transform_indices = @transform_14, window_bounds = array<i64: 1, 32, 8>}]} {
    %c0 = arith.constant 0 : index
    %c0_0 = arith.constant 0 : index
    %c0_1 = arith.constant 0 : index
    %0 = vector.load %arg2[%c0, %c0_0, %c0_1] : memref<1x16x16xf32, #tpu.memory_space<vmem>>, vector<1x16x16xf32>
    %1 = vector.shape_cast %0 : vector<1x16x16xf32> to vector<16x16xf32>
    %cst = arith.constant 0.000000e+00 : f32
    %2 = vector.broadcast %cst : f32 to vector<16x16xf32>
    %3 = arith.cmpf ogt, %1, %2 : vector<16x16xf32>
    %c0_2 = arith.constant 0 : index
    %c0_3 = arith.constant 0 : index
    %4 = vector.load %arg1[%c0_2, %c0_3] : memref<32x16xf32, #tpu.memory_space<vmem>>, vector<32x16xf32>
    %c0_4 = arith.constant 0 : index
    %c0_5 = arith.constant 0 : index
    %c0_6 = arith.constant 0 : index
    %5 = vector.load %arg3[%c0_4, %c0_5, %c0_6] : memref<1x16x64xf32, #tpu.memory_space<vmem>>, vector<1x16x64xf32>
    %6 = vector.shape_cast %5 : vector<1x16x64xf32> to vector<16x64xf32>
    %cst_7 = arith.constant dense<0.000000e+00> : vector<32x64xf32>
    %7 = tpu.matmul %4, %6, %cst_7 {dimension_numbers = #tpu.dot_dimension_numbers<[1], [0], [0], [1], [0, 0, 1, 1], [], []>} : vector<32x16xf32>, vector<16x64xf32>, vector<32x64xf32> -> vector<32x64xf32>
    %c0_8 = arith.constant 0 : index
    %c0_9 = arith.constant 0 : index
    %c0_10 = arith.constant 0 : index
    %8 = vector.load %arg4[%c0_8, %c0_9, %c0_10] : memref<1x1x64xf32, #tpu.memory_space<vmem>>, vector<1x1x64xf32>
    %9 = vector.shape_cast %8 : vector<1x1x64xf32> to vector<1x64xf32>
    %10 = vector.broadcast %9 : vector<1x64xf32> to vector<32x64xf32>
    %11 = arith.addf %7, %10 : vector<32x64xf32>
    %12 = vector.extract_strided_slice %11 {offsets = [0, 0], sizes = [32, 32], strides = [1, 1]} : vector<32x64xf32> to vector<32x32xf32>
    %cst_11 = arith.constant 0.000000e+00 : f32
    %13 = vector.broadcast %cst_11 : f32 to vector<32x32xf32>
    %14 = arith.cmpf oge, %12, %13 : vector<32x32xf32>
    %cst_12 = arith.constant 2.000000e-01 : f32
    %15 = vector.broadcast %cst_12 : f32 to vector<32x32xf32>
    %16 = arith.mulf %15, %12 : vector<32x32xf32>
    %17 = arith.select %14, %12, %16 : vector<32x32xi1>, vector<32x32xf32>
    %18 = vector.extract_strided_slice %11 {offsets = [0, 32], sizes = [32, 32], strides = [1, 1]} : vector<32x64xf32> to vector<32x32xf32>
    %c0_13 = arith.constant 0 : index
    %c0_14 = arith.constant 0 : index
    %c0_15 = arith.constant 0 : index
    %19 = vector.load %arg5[%c0_13, %c0_14, %c0_15] : memref<1x32x2xf32, #tpu.memory_space<vmem>>, vector<1x32x2xf32>
    %20 = vector.shape_cast %19 : vector<1x32x2xf32> to vector<32x2xf32>
    %cst_16 = arith.constant dense<0.000000e+00> : vector<32x2xf32>
    %21 = tpu.matmul %17, %20, %cst_16 {dimension_numbers = #tpu.dot_dimension_numbers<[1], [0], [0], [1], [0, 0, 1, 1], [], []>} : vector<32x32xf32>, vector<32x2xf32>, vector<32x2xf32> -> vector<32x2xf32>
    %c0_17 = arith.constant 0 : index
    %c0_18 = arith.constant 0 : index
    %c0_19 = arith.constant 0 : index
    %22 = vector.load %arg6[%c0_17, %c0_18, %c0_19] : memref<1x1x2xf32, #tpu.memory_space<vmem>>, vector<1x1x2xf32>
    %23 = vector.shape_cast %22 : vector<1x1x2xf32> to vector<1x2xf32>
    %24 = vector.broadcast %23 : vector<1x2xf32> to vector<32x2xf32>
    %25 = arith.addf %21, %24 : vector<32x2xf32>
    %26 = vector.extract_strided_slice %17 {offsets = [0, 0], sizes = [16, 32], strides = [1, 1]} : vector<32x32xf32> to vector<16x32xf32>
    %27 = vector.extract_strided_slice %25 {offsets = [0, 0], sizes = [16, 1], strides = [1, 1]} : vector<32x2xf32> to vector<16x1xf32>
    %28 = vector.extract_strided_slice %25 {offsets = [0, 1], sizes = [16, 1], strides = [1, 1]} : vector<32x2xf32> to vector<16x1xf32>
    %29 = tpu.transpose %28, [1, 0] : vector<16x1xf32> -> vector<1x16xf32>
    %30 = vector.broadcast %27 : vector<16x1xf32> to vector<16x16xf32>
    %31 = vector.broadcast %29 : vector<1x16xf32> to vector<16x16xf32>
    %32 = arith.addf %30, %31 : vector<16x16xf32>
    %cst_20 = arith.constant 0.000000e+00 : f32
    %33 = vector.broadcast %cst_20 : f32 to vector<16x16xf32>
    %34 = arith.cmpf oge, %32, %33 : vector<16x16xf32>
    %cst_21 = arith.constant 2.000000e-01 : f32
    %35 = vector.broadcast %cst_21 : f32 to vector<16x16xf32>
    %36 = arith.mulf %35, %32 : vector<16x16xf32>
    %37 = arith.select %34, %32, %36 : vector<16x16xi1>, vector<16x16xf32>
    %cst_22 = arith.constant 0.000000e+00 : f32
    %38 = vector.broadcast %cst_22 : f32 to vector<16x16xf32>
    %39 = arith.subf %38, %37 : vector<16x16xf32>
    %40 = math.exp %39 : vector<16x16xf32>
    %cst_23 = arith.constant 0.000000e+00 : f32
    %41 = vector.broadcast %cst_23 : f32 to vector<16x16xf32>
    %42 = arith.select %3, %40, %41 : vector<16x16xi1>, vector<16x16xf32>
    %cst_24 = arith.constant dense<0.000000e+00> : vector<16xf32>
    %43 = vector.multi_reduction <add>, %42, %cst_24 [1] : vector<16x16xf32> to vector<16xf32>
    %44 = vector.shape_cast %43 : vector<16xf32> to vector<16x1xf32>
    %cst_25 = arith.constant 9.000000e-15 : f32
    %45 = vector.broadcast %cst_25 : f32 to vector<16x1xf32>
    %46 = arith.addf %44, %45 : vector<16x1xf32>
    %47 = tpu.reciprocal %46 : vector<16x1xf32> -> vector<16x1xf32>
    %cst_26 = arith.constant dense<0.000000e+00> : vector<16x32xf32>
    %48 = tpu.matmul %42, %26, %cst_26 {dimension_numbers = #tpu.dot_dimension_numbers<[1], [0], [0], [1], [0, 0, 1, 1], [], []>} : vector<16x16xf32>, vector<16x32xf32>, vector<16x32xf32> -> vector<16x32xf32>
    %49 = vector.broadcast %47 : vector<16x1xf32> to vector<16x32xf32>
    %50 = arith.mulf %48, %49 : vector<16x32xf32>
    %51 = vector.extract_strided_slice %18 {offsets = [0, 0], sizes = [16, 32], strides = [1, 1]} : vector<32x32xf32> to vector<16x32xf32>
    %52 = arith.addf %50, %51 : vector<16x32xf32>
    %cst_27 = arith.constant 0.000000e+00 : f32
    %53 = vector.broadcast %cst_27 : f32 to vector<16x32xf32>
    %54 = arith.cmpf oge, %52, %53 : vector<16x32xf32>
    %cst_28 = arith.constant 2.000000e-01 : f32
    %55 = vector.broadcast %cst_28 : f32 to vector<16x32xf32>
    %56 = arith.mulf %55, %52 : vector<16x32xf32>
    %57 = arith.select %54, %52, %56 : vector<16x32xi1>, vector<16x32xf32>
    %58 = vector.extract_strided_slice %17 {offsets = [16, 0], sizes = [16, 32], strides = [1, 1]} : vector<32x32xf32> to vector<16x32xf32>
    %59 = vector.extract_strided_slice %25 {offsets = [16, 0], sizes = [16, 1], strides = [1, 1]} : vector<32x2xf32> to vector<16x1xf32>
    %60 = vector.extract_strided_slice %25 {offsets = [16, 1], sizes = [16, 1], strides = [1, 1]} : vector<32x2xf32> to vector<16x1xf32>
    %61 = tpu.transpose %60, [1, 0] : vector<16x1xf32> -> vector<1x16xf32>
    %62 = vector.broadcast %59 : vector<16x1xf32> to vector<16x16xf32>
    %63 = vector.broadcast %61 : vector<1x16xf32> to vector<16x16xf32>
    %64 = arith.addf %62, %63 : vector<16x16xf32>
    %cst_29 = arith.constant 0.000000e+00 : f32
    %65 = vector.broadcast %cst_29 : f32 to vector<16x16xf32>
    %66 = arith.cmpf oge, %64, %65 : vector<16x16xf32>
    %cst_30 = arith.constant 2.000000e-01 : f32
    %67 = vector.broadcast %cst_30 : f32 to vector<16x16xf32>
    %68 = arith.mulf %67, %64 : vector<16x16xf32>
    %69 = arith.select %66, %64, %68 : vector<16x16xi1>, vector<16x16xf32>
    %cst_31 = arith.constant 0.000000e+00 : f32
    %70 = vector.broadcast %cst_31 : f32 to vector<16x16xf32>
    %71 = arith.subf %70, %69 : vector<16x16xf32>
    %72 = math.exp %71 : vector<16x16xf32>
    %cst_32 = arith.constant 0.000000e+00 : f32
    %73 = vector.broadcast %cst_32 : f32 to vector<16x16xf32>
    %74 = arith.select %3, %72, %73 : vector<16x16xi1>, vector<16x16xf32>
    %cst_33 = arith.constant dense<0.000000e+00> : vector<16xf32>
    %75 = vector.multi_reduction <add>, %74, %cst_33 [1] : vector<16x16xf32> to vector<16xf32>
    %76 = vector.shape_cast %75 : vector<16xf32> to vector<16x1xf32>
    %cst_34 = arith.constant 9.000000e-15 : f32
    %77 = vector.broadcast %cst_34 : f32 to vector<16x1xf32>
    %78 = arith.addf %76, %77 : vector<16x1xf32>
    %79 = tpu.reciprocal %78 : vector<16x1xf32> -> vector<16x1xf32>
    %cst_35 = arith.constant dense<0.000000e+00> : vector<16x32xf32>
    %80 = tpu.matmul %74, %58, %cst_35 {dimension_numbers = #tpu.dot_dimension_numbers<[1], [0], [0], [1], [0, 0, 1, 1], [], []>} : vector<16x16xf32>, vector<16x32xf32>, vector<16x32xf32> -> vector<16x32xf32>
    %81 = vector.broadcast %79 : vector<16x1xf32> to vector<16x32xf32>
    %82 = arith.mulf %80, %81 : vector<16x32xf32>
    %83 = vector.extract_strided_slice %18 {offsets = [16, 0], sizes = [16, 32], strides = [1, 1]} : vector<32x32xf32> to vector<16x32xf32>
    %84 = arith.addf %82, %83 : vector<16x32xf32>
    %cst_36 = arith.constant 0.000000e+00 : f32
    %85 = vector.broadcast %cst_36 : f32 to vector<16x32xf32>
    %86 = arith.cmpf oge, %84, %85 : vector<16x32xf32>
    %cst_37 = arith.constant 2.000000e-01 : f32
    %87 = vector.broadcast %cst_37 : f32 to vector<16x32xf32>
    %88 = arith.mulf %87, %84 : vector<16x32xf32>
    %89 = arith.select %86, %84, %88 : vector<16x32xi1>, vector<16x32xf32>
    %90 = tpu.concatenate %57, %89 in 0 : vector<16x32xf32>, vector<16x32xf32> -> vector<32x32xf32>
    %c0_38 = arith.constant 0 : index
    %c0_39 = arith.constant 0 : index
    %c0_40 = arith.constant 0 : index
    %91 = vector.load %arg7[%c0_38, %c0_39, %c0_40] : memref<1x32x64xf32, #tpu.memory_space<vmem>>, vector<1x32x64xf32>
    %92 = vector.shape_cast %91 : vector<1x32x64xf32> to vector<32x64xf32>
    %cst_41 = arith.constant dense<0.000000e+00> : vector<32x64xf32>
    %93 = tpu.matmul %90, %92, %cst_41 {dimension_numbers = #tpu.dot_dimension_numbers<[1], [0], [0], [1], [0, 0, 1, 1], [], []>} : vector<32x32xf32>, vector<32x64xf32>, vector<32x64xf32> -> vector<32x64xf32>
    %c0_42 = arith.constant 0 : index
    %c0_43 = arith.constant 0 : index
    %c0_44 = arith.constant 0 : index
    %94 = vector.load %arg8[%c0_42, %c0_43, %c0_44] : memref<1x1x64xf32, #tpu.memory_space<vmem>>, vector<1x1x64xf32>
    %95 = vector.shape_cast %94 : vector<1x1x64xf32> to vector<1x64xf32>
    %96 = vector.broadcast %95 : vector<1x64xf32> to vector<32x64xf32>
    %97 = arith.addf %93, %96 : vector<32x64xf32>
    %98 = vector.extract_strided_slice %97 {offsets = [0, 0], sizes = [32, 32], strides = [1, 1]} : vector<32x64xf32> to vector<32x32xf32>
    %cst_45 = arith.constant 0.000000e+00 : f32
    %99 = vector.broadcast %cst_45 : f32 to vector<32x32xf32>
    %100 = arith.cmpf oge, %98, %99 : vector<32x32xf32>
    %cst_46 = arith.constant 2.000000e-01 : f32
    %101 = vector.broadcast %cst_46 : f32 to vector<32x32xf32>
    %102 = arith.mulf %101, %98 : vector<32x32xf32>
    %103 = arith.select %100, %98, %102 : vector<32x32xi1>, vector<32x32xf32>
    %104 = vector.extract_strided_slice %97 {offsets = [0, 32], sizes = [32, 32], strides = [1, 1]} : vector<32x64xf32> to vector<32x32xf32>
    %c0_47 = arith.constant 0 : index
    %c0_48 = arith.constant 0 : index
    %c0_49 = arith.constant 0 : index
    %105 = vector.load %arg9[%c0_47, %c0_48, %c0_49] : memref<1x32x2xf32, #tpu.memory_space<vmem>>, vector<1x32x2xf32>
    %106 = vector.shape_cast %105 : vector<1x32x2xf32> to vector<32x2xf32>
    %cst_50 = arith.constant dense<0.000000e+00> : vector<32x2xf32>
    %107 = tpu.matmul %103, %106, %cst_50 {dimension_numbers = #tpu.dot_dimension_numbers<[1], [0], [0], [1], [0, 0, 1, 1], [], []>} : vector<32x32xf32>, vector<32x2xf32>, vector<32x2xf32> -> vector<32x2xf32>
    %c0_51 = arith.constant 0 : index
    %c0_52 = arith.constant 0 : index
    %c0_53 = arith.constant 0 : index
    %108 = vector.load %arg10[%c0_51, %c0_52, %c0_53] : memref<1x1x2xf32, #tpu.memory_space<vmem>>, vector<1x1x2xf32>
    %109 = vector.shape_cast %108 : vector<1x1x2xf32> to vector<1x2xf32>
    %110 = vector.broadcast %109 : vector<1x2xf32> to vector<32x2xf32>
    %111 = arith.addf %107, %110 : vector<32x2xf32>
    %112 = vector.extract_strided_slice %103 {offsets = [0, 0], sizes = [16, 32], strides = [1, 1]} : vector<32x32xf32> to vector<16x32xf32>
    %113 = vector.extract_strided_slice %111 {offsets = [0, 0], sizes = [16, 1], strides = [1, 1]} : vector<32x2xf32> to vector<16x1xf32>
    %114 = vector.extract_strided_slice %111 {offsets = [0, 1], sizes = [16, 1], strides = [1, 1]} : vector<32x2xf32> to vector<16x1xf32>
    %115 = tpu.transpose %114, [1, 0] : vector<16x1xf32> -> vector<1x16xf32>
    %116 = vector.broadcast %113 : vector<16x1xf32> to vector<16x16xf32>
    %117 = vector.broadcast %115 : vector<1x16xf32> to vector<16x16xf32>
    %118 = arith.addf %116, %117 : vector<16x16xf32>
    %cst_54 = arith.constant 0.000000e+00 : f32
    %119 = vector.broadcast %cst_54 : f32 to vector<16x16xf32>
    %120 = arith.cmpf oge, %118, %119 : vector<16x16xf32>
    %cst_55 = arith.constant 2.000000e-01 : f32
    %121 = vector.broadcast %cst_55 : f32 to vector<16x16xf32>
    %122 = arith.mulf %121, %118 : vector<16x16xf32>
    %123 = arith.select %120, %118, %122 : vector<16x16xi1>, vector<16x16xf32>
    %cst_56 = arith.constant 0.000000e+00 : f32
    %124 = vector.broadcast %cst_56 : f32 to vector<16x16xf32>
    %125 = arith.subf %124, %123 : vector<16x16xf32>
    %126 = math.exp %125 : vector<16x16xf32>
    %cst_57 = arith.constant 0.000000e+00 : f32
    %127 = vector.broadcast %cst_57 : f32 to vector<16x16xf32>
    %128 = arith.select %3, %126, %127 : vector<16x16xi1>, vector<16x16xf32>
    %cst_58 = arith.constant dense<0.000000e+00> : vector<16xf32>
    %129 = vector.multi_reduction <add>, %128, %cst_58 [1] : vector<16x16xf32> to vector<16xf32>
    %130 = vector.shape_cast %129 : vector<16xf32> to vector<16x1xf32>
    %cst_59 = arith.constant 9.000000e-15 : f32
    %131 = vector.broadcast %cst_59 : f32 to vector<16x1xf32>
    %132 = arith.addf %130, %131 : vector<16x1xf32>
    %133 = tpu.reciprocal %132 : vector<16x1xf32> -> vector<16x1xf32>
    %cst_60 = arith.constant dense<0.000000e+00> : vector<16x32xf32>
    %134 = tpu.matmul %128, %112, %cst_60 {dimension_numbers = #tpu.dot_dimension_numbers<[1], [0], [0], [1], [0, 0, 1, 1], [], []>} : vector<16x16xf32>, vector<16x32xf32>, vector<16x32xf32> -> vector<16x32xf32>
    %135 = vector.broadcast %133 : vector<16x1xf32> to vector<16x32xf32>
    %136 = arith.mulf %134, %135 : vector<16x32xf32>
    %137 = vector.extract_strided_slice %104 {offsets = [0, 0], sizes = [16, 32], strides = [1, 1]} : vector<32x32xf32> to vector<16x32xf32>
    %138 = arith.addf %136, %137 : vector<16x32xf32>
    %cst_61 = arith.constant 0.000000e+00 : f32
    %139 = vector.broadcast %cst_61 : f32 to vector<16x32xf32>
    %140 = arith.cmpf oge, %138, %139 : vector<16x32xf32>
    %cst_62 = arith.constant 2.000000e-01 : f32
    %141 = vector.broadcast %cst_62 : f32 to vector<16x32xf32>
    %142 = arith.mulf %141, %138 : vector<16x32xf32>
    %143 = arith.select %140, %138, %142 : vector<16x32xi1>, vector<16x32xf32>
    %144 = vector.extract_strided_slice %103 {offsets = [16, 0], sizes = [16, 32], strides = [1, 1]} : vector<32x32xf32> to vector<16x32xf32>
    %145 = vector.extract_strided_slice %111 {offsets = [16, 0], sizes = [16, 1], strides = [1, 1]} : vector<32x2xf32> to vector<16x1xf32>
    %146 = vector.extract_strided_slice %111 {offsets = [16, 1], sizes = [16, 1], strides = [1, 1]} : vector<32x2xf32> to vector<16x1xf32>
    %147 = tpu.transpose %146, [1, 0] : vector<16x1xf32> -> vector<1x16xf32>
    %148 = vector.broadcast %145 : vector<16x1xf32> to vector<16x16xf32>
    %149 = vector.broadcast %147 : vector<1x16xf32> to vector<16x16xf32>
    %150 = arith.addf %148, %149 : vector<16x16xf32>
    %cst_63 = arith.constant 0.000000e+00 : f32
    %151 = vector.broadcast %cst_63 : f32 to vector<16x16xf32>
    %152 = arith.cmpf oge, %150, %151 : vector<16x16xf32>
    %cst_64 = arith.constant 2.000000e-01 : f32
    %153 = vector.broadcast %cst_64 : f32 to vector<16x16xf32>
    %154 = arith.mulf %153, %150 : vector<16x16xf32>
    %155 = arith.select %152, %150, %154 : vector<16x16xi1>, vector<16x16xf32>
    %cst_65 = arith.constant 0.000000e+00 : f32
    %156 = vector.broadcast %cst_65 : f32 to vector<16x16xf32>
    %157 = arith.subf %156, %155 : vector<16x16xf32>
    %158 = math.exp %157 : vector<16x16xf32>
    %cst_66 = arith.constant 0.000000e+00 : f32
    %159 = vector.broadcast %cst_66 : f32 to vector<16x16xf32>
    %160 = arith.select %3, %158, %159 : vector<16x16xi1>, vector<16x16xf32>
    %cst_67 = arith.constant dense<0.000000e+00> : vector<16xf32>
    %161 = vector.multi_reduction <add>, %160, %cst_67 [1] : vector<16x16xf32> to vector<16xf32>
    %162 = vector.shape_cast %161 : vector<16xf32> to vector<16x1xf32>
    %cst_68 = arith.constant 9.000000e-15 : f32
    %163 = vector.broadcast %cst_68 : f32 to vector<16x1xf32>
    %164 = arith.addf %162, %163 : vector<16x1xf32>
    %165 = tpu.reciprocal %164 : vector<16x1xf32> -> vector<16x1xf32>
    %cst_69 = arith.constant dense<0.000000e+00> : vector<16x32xf32>
    %166 = tpu.matmul %160, %144, %cst_69 {dimension_numbers = #tpu.dot_dimension_numbers<[1], [0], [0], [1], [0, 0, 1, 1], [], []>} : vector<16x16xf32>, vector<16x32xf32>, vector<16x32xf32> -> vector<16x32xf32>
    %167 = vector.broadcast %165 : vector<16x1xf32> to vector<16x32xf32>
    %168 = arith.mulf %166, %167 : vector<16x32xf32>
    %169 = vector.extract_strided_slice %104 {offsets = [16, 0], sizes = [16, 32], strides = [1, 1]} : vector<32x32xf32> to vector<16x32xf32>
    %170 = arith.addf %168, %169 : vector<16x32xf32>
    %cst_70 = arith.constant 0.000000e+00 : f32
    %171 = vector.broadcast %cst_70 : f32 to vector<16x32xf32>
    %172 = arith.cmpf oge, %170, %171 : vector<16x32xf32>
    %cst_71 = arith.constant 2.000000e-01 : f32
    %173 = vector.broadcast %cst_71 : f32 to vector<16x32xf32>
    %174 = arith.mulf %173, %170 : vector<16x32xf32>
    %175 = arith.select %172, %170, %174 : vector<16x32xi1>, vector<16x32xf32>
    %176 = tpu.concatenate %143, %175 in 0 : vector<16x32xf32>, vector<16x32xf32> -> vector<32x32xf32>
    %c0_72 = arith.constant 0 : index
    %c0_73 = arith.constant 0 : index
    %c0_74 = arith.constant 0 : index
    %177 = vector.load %arg11[%c0_72, %c0_73, %c0_74] : memref<1x32x16xf32, #tpu.memory_space<vmem>>, vector<1x32x16xf32>
    %178 = vector.shape_cast %177 : vector<1x32x16xf32> to vector<32x16xf32>
    %cst_75 = arith.constant dense<0.000000e+00> : vector<32x16xf32>
    %179 = tpu.matmul %176, %178, %cst_75 {dimension_numbers = #tpu.dot_dimension_numbers<[1], [0], [0], [1], [0, 0, 1, 1], [], []>} : vector<32x32xf32>, vector<32x16xf32>, vector<32x16xf32> -> vector<32x16xf32>
    %c0_76 = arith.constant 0 : index
    %c0_77 = arith.constant 0 : index
    %c0_78 = arith.constant 0 : index
    %180 = vector.load %arg12[%c0_76, %c0_77, %c0_78] : memref<1x1x16xf32, #tpu.memory_space<vmem>>, vector<1x1x16xf32>
    %181 = vector.shape_cast %180 : vector<1x1x16xf32> to vector<1x16xf32>
    %182 = vector.broadcast %181 : vector<1x16xf32> to vector<32x16xf32>
    %183 = arith.addf %179, %182 : vector<32x16xf32>
    %184 = vector.extract_strided_slice %183 {offsets = [0, 0], sizes = [32, 8], strides = [1, 1]} : vector<32x16xf32> to vector<32x8xf32>
    %cst_79 = arith.constant 0.000000e+00 : f32
    %185 = vector.broadcast %cst_79 : f32 to vector<32x8xf32>
    %186 = arith.cmpf oge, %184, %185 : vector<32x8xf32>
    %cst_80 = arith.constant 2.000000e-01 : f32
    %187 = vector.broadcast %cst_80 : f32 to vector<32x8xf32>
    %188 = arith.mulf %187, %184 : vector<32x8xf32>
    %189 = arith.select %186, %184, %188 : vector<32x8xi1>, vector<32x8xf32>
    %190 = vector.extract_strided_slice %183 {offsets = [0, 8], sizes = [32, 8], strides = [1, 1]} : vector<32x16xf32> to vector<32x8xf32>
    %c0_81 = arith.constant 0 : index
    %c0_82 = arith.constant 0 : index
    %c0_83 = arith.constant 0 : index
    %191 = vector.load %arg13[%c0_81, %c0_82, %c0_83] : memref<1x8x2xf32, #tpu.memory_space<vmem>>, vector<1x8x2xf32>
    %192 = vector.shape_cast %191 : vector<1x8x2xf32> to vector<8x2xf32>
    %cst_84 = arith.constant dense<0.000000e+00> : vector<32x2xf32>
    %193 = tpu.matmul %189, %192, %cst_84 {dimension_numbers = #tpu.dot_dimension_numbers<[1], [0], [0], [1], [0, 0, 1, 1], [], []>} : vector<32x8xf32>, vector<8x2xf32>, vector<32x2xf32> -> vector<32x2xf32>
    %c0_85 = arith.constant 0 : index
    %c0_86 = arith.constant 0 : index
    %c0_87 = arith.constant 0 : index
    %194 = vector.load %arg14[%c0_85, %c0_86, %c0_87] : memref<1x1x2xf32, #tpu.memory_space<vmem>>, vector<1x1x2xf32>
    %195 = vector.shape_cast %194 : vector<1x1x2xf32> to vector<1x2xf32>
    %196 = vector.broadcast %195 : vector<1x2xf32> to vector<32x2xf32>
    %197 = arith.addf %193, %196 : vector<32x2xf32>
    %198 = vector.extract_strided_slice %189 {offsets = [0, 0], sizes = [16, 8], strides = [1, 1]} : vector<32x8xf32> to vector<16x8xf32>
    %199 = vector.extract_strided_slice %197 {offsets = [0, 0], sizes = [16, 1], strides = [1, 1]} : vector<32x2xf32> to vector<16x1xf32>
    %200 = vector.extract_strided_slice %197 {offsets = [0, 1], sizes = [16, 1], strides = [1, 1]} : vector<32x2xf32> to vector<16x1xf32>
    %201 = tpu.transpose %200, [1, 0] : vector<16x1xf32> -> vector<1x16xf32>
    %202 = vector.broadcast %199 : vector<16x1xf32> to vector<16x16xf32>
    %203 = vector.broadcast %201 : vector<1x16xf32> to vector<16x16xf32>
    %204 = arith.addf %202, %203 : vector<16x16xf32>
    %cst_88 = arith.constant 0.000000e+00 : f32
    %205 = vector.broadcast %cst_88 : f32 to vector<16x16xf32>
    %206 = arith.cmpf oge, %204, %205 : vector<16x16xf32>
    %cst_89 = arith.constant 2.000000e-01 : f32
    %207 = vector.broadcast %cst_89 : f32 to vector<16x16xf32>
    %208 = arith.mulf %207, %204 : vector<16x16xf32>
    %209 = arith.select %206, %204, %208 : vector<16x16xi1>, vector<16x16xf32>
    %cst_90 = arith.constant 0.000000e+00 : f32
    %210 = vector.broadcast %cst_90 : f32 to vector<16x16xf32>
    %211 = arith.subf %210, %209 : vector<16x16xf32>
    %212 = math.exp %211 : vector<16x16xf32>
    %cst_91 = arith.constant 0.000000e+00 : f32
    %213 = vector.broadcast %cst_91 : f32 to vector<16x16xf32>
    %214 = arith.select %3, %212, %213 : vector<16x16xi1>, vector<16x16xf32>
    %cst_92 = arith.constant dense<0.000000e+00> : vector<16xf32>
    %215 = vector.multi_reduction <add>, %214, %cst_92 [1] : vector<16x16xf32> to vector<16xf32>
    %216 = vector.shape_cast %215 : vector<16xf32> to vector<16x1xf32>
    %cst_93 = arith.constant 9.000000e-15 : f32
    %217 = vector.broadcast %cst_93 : f32 to vector<16x1xf32>
    %218 = arith.addf %216, %217 : vector<16x1xf32>
    %219 = tpu.reciprocal %218 : vector<16x1xf32> -> vector<16x1xf32>
    %cst_94 = arith.constant dense<0.000000e+00> : vector<16x8xf32>
    %220 = tpu.matmul %214, %198, %cst_94 {dimension_numbers = #tpu.dot_dimension_numbers<[1], [0], [0], [1], [0, 0, 1, 1], [], []>} : vector<16x16xf32>, vector<16x8xf32>, vector<16x8xf32> -> vector<16x8xf32>
    %221 = vector.broadcast %219 : vector<16x1xf32> to vector<16x8xf32>
    %222 = arith.mulf %220, %221 : vector<16x8xf32>
    %223 = vector.extract_strided_slice %190 {offsets = [0, 0], sizes = [16, 8], strides = [1, 1]} : vector<32x8xf32> to vector<16x8xf32>
    %224 = arith.addf %222, %223 : vector<16x8xf32>
    %cst_95 = arith.constant 0.000000e+00 : f32
    %225 = vector.broadcast %cst_95 : f32 to vector<16x8xf32>
    %226 = arith.cmpf oge, %224, %225 : vector<16x8xf32>
    %cst_96 = arith.constant 2.000000e-01 : f32
    %227 = vector.broadcast %cst_96 : f32 to vector<16x8xf32>
    %228 = arith.mulf %227, %224 : vector<16x8xf32>
    %229 = arith.select %226, %224, %228 : vector<16x8xi1>, vector<16x8xf32>
    %230 = vector.extract_strided_slice %189 {offsets = [16, 0], sizes = [16, 8], strides = [1, 1]} : vector<32x8xf32> to vector<16x8xf32>
    %231 = vector.extract_strided_slice %197 {offsets = [16, 0], sizes = [16, 1], strides = [1, 1]} : vector<32x2xf32> to vector<16x1xf32>
    %232 = vector.extract_strided_slice %197 {offsets = [16, 1], sizes = [16, 1], strides = [1, 1]} : vector<32x2xf32> to vector<16x1xf32>
    %233 = tpu.transpose %232, [1, 0] : vector<16x1xf32> -> vector<1x16xf32>
    %234 = vector.broadcast %231 : vector<16x1xf32> to vector<16x16xf32>
    %235 = vector.broadcast %233 : vector<1x16xf32> to vector<16x16xf32>
    %236 = arith.addf %234, %235 : vector<16x16xf32>
    %cst_97 = arith.constant 0.000000e+00 : f32
    %237 = vector.broadcast %cst_97 : f32 to vector<16x16xf32>
    %238 = arith.cmpf oge, %236, %237 : vector<16x16xf32>
    %cst_98 = arith.constant 2.000000e-01 : f32
    %239 = vector.broadcast %cst_98 : f32 to vector<16x16xf32>
    %240 = arith.mulf %239, %236 : vector<16x16xf32>
    %241 = arith.select %238, %236, %240 : vector<16x16xi1>, vector<16x16xf32>
    %cst_99 = arith.constant 0.000000e+00 : f32
    %242 = vector.broadcast %cst_99 : f32 to vector<16x16xf32>
    %243 = arith.subf %242, %241 : vector<16x16xf32>
    %244 = math.exp %243 : vector<16x16xf32>
    %cst_100 = arith.constant 0.000000e+00 : f32
    %245 = vector.broadcast %cst_100 : f32 to vector<16x16xf32>
    %246 = arith.select %3, %244, %245 : vector<16x16xi1>, vector<16x16xf32>
    %cst_101 = arith.constant dense<0.000000e+00> : vector<16xf32>
    %247 = vector.multi_reduction <add>, %246, %cst_101 [1] : vector<16x16xf32> to vector<16xf32>
    %248 = vector.shape_cast %247 : vector<16xf32> to vector<16x1xf32>
    %cst_102 = arith.constant 9.000000e-15 : f32
    %249 = vector.broadcast %cst_102 : f32 to vector<16x1xf32>
    %250 = arith.addf %248, %249 : vector<16x1xf32>
    %251 = tpu.reciprocal %250 : vector<16x1xf32> -> vector<16x1xf32>
    %cst_103 = arith.constant dense<0.000000e+00> : vector<16x8xf32>
    %252 = tpu.matmul %246, %230, %cst_103 {dimension_numbers = #tpu.dot_dimension_numbers<[1], [0], [0], [1], [0, 0, 1, 1], [], []>} : vector<16x16xf32>, vector<16x8xf32>, vector<16x8xf32> -> vector<16x8xf32>
    %253 = vector.broadcast %251 : vector<16x1xf32> to vector<16x8xf32>
    %254 = arith.mulf %252, %253 : vector<16x8xf32>
    %255 = vector.extract_strided_slice %190 {offsets = [16, 0], sizes = [16, 8], strides = [1, 1]} : vector<32x8xf32> to vector<16x8xf32>
    %256 = arith.addf %254, %255 : vector<16x8xf32>
    %cst_104 = arith.constant 0.000000e+00 : f32
    %257 = vector.broadcast %cst_104 : f32 to vector<16x8xf32>
    %258 = arith.cmpf oge, %256, %257 : vector<16x8xf32>
    %cst_105 = arith.constant 2.000000e-01 : f32
    %259 = vector.broadcast %cst_105 : f32 to vector<16x8xf32>
    %260 = arith.mulf %259, %256 : vector<16x8xf32>
    %261 = arith.select %258, %256, %260 : vector<16x8xi1>, vector<16x8xf32>
    %262 = tpu.concatenate %229, %261 in 0 : vector<16x8xf32>, vector<16x8xf32> -> vector<32x8xf32>
    %c0_106 = arith.constant 0 : index
    %c0_107 = arith.constant 0 : index
    %c0_108 = arith.constant 0 : index
    %263 = vector.load %arg15[%c0_106, %c0_107, %c0_108] : memref<1x32x8xf32, #tpu.memory_space<vmem>>, vector<1x32x8xf32>
    %264 = vector.shape_cast %263 : vector<1x32x8xf32> to vector<32x8xf32>
    %265 = vector.shape_cast %262 : vector<32x8xf32> to vector<1x32x8xf32>
    tpu.vector_store %arg15[%c0_106, %c0_107, %c0_108], %265 {strides = array<i32>} : memref<1x32x8xf32, #tpu.memory_space<vmem>>, vector<1x32x8xf32>,
    return
  }
  func.func @transform_0(%arg0: i32) -> (i32, i32) {
    %c0_i32 = arith.constant 0 : i32
    %c0_i32_0 = arith.constant 0 : i32
    %c0_i32_1 = arith.constant 0 : i32
    return %c0_i32, %c0_i32_0 : i32, i32
  }
  func.func @transform_1(%arg0: i32) -> (i32, i32, i32) {
    %c0_i32 = arith.constant 0 : i32
    %c0_i32_0 = arith.constant 0 : i32
    %c0_i32_1 = arith.constant 0 : i32
    return %arg0, %c0_i32, %c0_i32_0 : i32, i32, i32
  }
  func.func @transform_2(%arg0: i32) -> (i32, i32, i32) {
    %c0_i32 = arith.constant 0 : i32
    %c0_i32_0 = arith.constant 0 : i32
    %c0_i32_1 = arith.constant 0 : i32
    return %arg0, %c0_i32, %c0_i32_0 : i32, i32, i32
  }
  func.func @transform_3(%arg0: i32) -> (i32, i32, i32) {
    %c0_i32 = arith.constant 0 : i32
    %c0_i32_0 = arith.constant 0 : i32
    %c0_i32_1 = arith.constant 0 : i32
    return %arg0, %c0_i32, %c0_i32_0 : i32, i32, i32
  }
  func.func @transform_4(%arg0: i32) -> (i32, i32, i32) {
    %c0_i32 = arith.constant 0 : i32
    %c0_i32_0 = arith.constant 0 : i32
    %c0_i32_1 = arith.constant 0 : i32
    return %arg0, %c0_i32, %c0_i32_0 : i32, i32, i32
  }
  func.func @transform_5(%arg0: i32) -> (i32, i32, i32) {
    %c0_i32 = arith.constant 0 : i32
    %c0_i32_0 = arith.constant 0 : i32
    %c0_i32_1 = arith.constant 0 : i32
    return %arg0, %c0_i32, %c0_i32_0 : i32, i32, i32
  }
  func.func @transform_6(%arg0: i32) -> (i32, i32, i32) {
    %c0_i32 = arith.constant 0 : i32
    %c0_i32_0 = arith.constant 0 : i32
    %c0_i32_1 = arith.constant 0 : i32
    return %arg0, %c0_i32, %c0_i32_0 : i32, i32, i32
  }
  func.func @transform_7(%arg0: i32) -> (i32, i32, i32) {
    %c0_i32 = arith.constant 0 : i32
    %c0_i32_0 = arith.constant 0 : i32
    %c0_i32_1 = arith.constant 0 : i32
    return %arg0, %c0_i32, %c0_i32_0 : i32, i32, i32
  }
  func.func @transform_8(%arg0: i32) -> (i32, i32, i32) {
    %c0_i32 = arith.constant 0 : i32
    %c0_i32_0 = arith.constant 0 : i32
    %c0_i32_1 = arith.constant 0 : i32
    return %arg0, %c0_i32, %c0_i32_0 : i32, i32, i32
  }
  func.func @transform_9(%arg0: i32) -> (i32, i32, i32) {
    %c0_i32 = arith.constant 0 : i32
    %c0_i32_0 = arith.constant 0 : i32
    %c0_i32_1 = arith.constant 0 : i32
    return %arg0, %c0_i32, %c0_i32_0 : i32, i32, i32
  }
  func.func @transform_10(%arg0: i32) -> (i32, i32, i32) {
    %c0_i32 = arith.constant 0 : i32
    %c0_i32_0 = arith.constant 0 : i32
    %c0_i32_1 = arith.constant 0 : i32
    return %arg0, %c0_i32, %c0_i32_0 : i32, i32, i32
  }
  func.func @transform_11(%arg0: i32) -> (i32, i32, i32) {
    %c0_i32 = arith.constant 0 : i32
    %c0_i32_0 = arith.constant 0 : i32
    %c0_i32_1 = arith.constant 0 : i32
    return %arg0, %c0_i32, %c0_i32_0 : i32, i32, i32
  }
  func.func @transform_12(%arg0: i32) -> (i32, i32, i32) {
    %c0_i32 = arith.constant 0 : i32
    %c0_i32_0 = arith.constant 0 : i32
    %c0_i32_1 = arith.constant 0 : i32
    return %arg0, %c0_i32, %c0_i32_0 : i32, i32, i32
  }
  func.func @transform_13(%arg0: i32) -> (i32, i32, i32) {
    %c0_i32 = arith.constant 0 : i32
    %c0_i32_0 = arith.constant 0 : i32
    %c0_i32_1 = arith.constant 0 : i32
    return %arg0, %c0_i32, %c0_i32_0 : i32, i32, i32
  }
  func.func @transform_14(%arg0: i32) -> (i32, i32, i32) {
    %c0_i32 = arith.constant 0 : i32
    %c0_i32_0 = arith.constant 0 : i32
    %c0_i32_1 = arith.constant 0 : i32
    return %arg0, %c0_i32, %c0_i32_0 : i32, i32, i32
  }
}

</mosaic_0001>

<llo_original>
// kernel: gat_forward.1
$region0: #{gat_forward.1}
  #allocation0 [shape = 'u32[]', space=smem, size = 0x4, offset = 0x4, fixed_abs, tag = 'smem constant byte address 0x4 - core index']
  #allocation1 [shape = 'u32[144,128]{1,0:T(1,128)}', space=vmem, size = 0x12000, scoped, tag = 'internal scratch']
  %s0 = inlined_call_operand.vmem [shape: f32[32,16], index: 0, kind: input, shape index: {}]
  %s1 = inlined_call_operand.vmem [shape: f32[3,16,16], index: 1, kind: input, shape index: {}]
  %s2 = inlined_call_operand.vmem [shape: f32[3,16,64], index: 2, kind: input, shape index: {}]
  %s3 = inlined_call_operand.vmem [shape: f32[3,1,64], index: 3, kind: input, shape index: {}]
  %s4 = inlined_call_operand.vmem [shape: f32[3,32,2], index: 4, kind: input, shape index: {}]
  %s5 = inlined_call_operand.vmem [shape: f32[3,1,2], index: 5, kind: input, shape index: {}]
  %s6 = inlined_call_operand.vmem [shape: f32[3,32,64], index: 6, kind: input, shape index: {}]
  %s7 = inlined_call_operand.vmem [shape: f32[3,1,64], index: 7, kind: input, shape index: {}]
  %s8 = inlined_call_operand.vmem [shape: f32[3,32,2], index: 8, kind: input, shape index: {}]
  %s9 = inlined_call_operand.vmem [shape: f32[3,1,2], index: 9, kind: input, shape index: {}]
  %s10 = inlined_call_operand.vmem [shape: f32[3,32,16], index: 10, kind: input, shape index: {}]
  %s11 = inlined_call_operand.vmem [shape: f32[3,1,16], index: 11, kind: input, shape index: {}]
  %s12 = inlined_call_operand.vmem [shape: f32[3,8,2], index: 12, kind: input, shape index: {}]
  %s13 = inlined_call_operand.vmem [shape: f32[3,1,2], index: 13, kind: input, shape index: {}]
  %s14 = inlined_call_operand.vmem [shape: f32[3,32,8], index: 14, kind: output, shape index: {}]
  %s15 = sld [smem:[#allocation0]]
  $region89: #{gat_forward.1} parent=0
    _
  %s17 = ssub.s32 1, %s15
  %s18 = scalar_select 0, %s17, %s15
  loop: start=0, step=1, limit=5
  $region2: #{gat_forward.1} parent=0 // loop_pre_header
    _
  $region3: #{gat_forward.1} parent=0 // loop_header
    %s20 = sphi 0, %s24
    %p21 = scmp.ge.s32.totalorder %s20, 5
    %s28 = sphi 0, %s28
    %s30 = sphi 0, %s28
    %s31 = sphi 0, %s30
    %s45 = sphi 0, %s31
    %s51 = sphi 0, %s53
    %s54 = sphi 0, %s51
    %s55 = sphi 0, %s54
    %s71 = sphi 0, %s55
    %s77 = sphi 0, %s79
    %s80 = sphi 0, %s77
    %s81 = sphi 0, %s80
    %s97 = sphi 0, %s81
    %s103 = sphi 0, %s105
    %s106 = sphi 0, %s103
    %s107 = sphi 0, %s106
    %s123 = sphi 0, %s107
    %s129 = sphi 0, %s131
    %s132 = sphi 0, %s129
    %s133 = sphi 0, %s132
    %s149 = sphi 0, %s133
    %s155 = sphi 0, %s157
    %s158 = sphi 0, %s155
    %s159 = sphi 0, %s158
    %s175 = sphi 0, %s159
    %s181 = sphi 0, %s183
    %s184 = sphi 0, %s181
    %s185 = sphi 0, %s184
    %s201 = sphi 0, %s185
    %s207 = sphi 0, %s209
    %s210 = sphi 0, %s207
    %s211 = sphi 0, %s210
    %s227 = sphi 0, %s211
    %s233 = sphi 0, %s235
    %s236 = sphi 0, %s233
    %s237 = sphi 0, %s236
    %s253 = sphi 0, %s237
    %s259 = sphi 0, %s261
    %s262 = sphi 0, %s259
    %s263 = sphi 0, %s262
    %s279 = sphi 0, %s263
    %s285 = sphi 0, %s287
    %s288 = sphi 0, %s285
    %s289 = sphi 0, %s288
    %s305 = sphi 0, %s289
    %s311 = sphi 0, %s313
    %s314 = sphi 0, %s311
    %s315 = sphi 0, %s314
    %s331 = sphi 0, %s315
    %s337 = sphi 0, %s339
    %s340 = sphi 0, %s337
    %s341 = sphi 0, %s340
    %s357 = sphi 0, %s341
    %s363 = sphi 0, %s365
    %s366 = sphi 0, %s363
    %s367 = sphi 0, %s366
    %s383 = sphi 0, %s367
    %s389 = sphi 0, %s391
    %s392 = sphi 0, %s389
    %s393 = sphi 0, %s392
    %s409 = sphi 0, %s393
  $region4: #{gat_forward.1} parent=0 // loop_header_branch
    %23 = sbr.rel (%p21) target = $region8
  $region5: #{gat_forward.1} parent=0 // loop_body
    %s25 = ssub.s32 %s20, 1
    %s26 = ssub.s32 %s20, 2
    %s27 = sadd.s32 %s20, 1
    %s29 = sadd.s32 %s28, 1
    %p32 = scmp.eq.s32.totalorder %s20, 2
    %p33 = scmp.ne.s32.totalorder %s28, %s30
    %p34 = scmp.eq.s32.totalorder %s20, 0
    %p35 = por %p33, %p34
    %p36 = scmp.ne.s32.totalorder %s28, %s30
    %p37 = scmp.eq.s32.totalorder %s25, 2
    %p38 = por %p36, %p37
    %p39 = scmp.ne.s32.totalorder %s30, %s31
    %p40 = scmp.eq.s32.totalorder %s25, 0
    %p41 = por %p39, %p40
    %p42 = scmp.ne.s32.totalorder %s30, %s31
    %p43 = scmp.eq.s32.totalorder %s26, 2
    %p44 = por %p42, %p43
    %p46 = scmp.ne.s32.totalorder %s31, %s45
    %p47 = scmp.eq.s32.totalorder %s26, 0
    %p48 = por %p46, %p47
    %s49 = ssub.s32 %s20, %s27
    %p50 = scmp.eq.s32.totalorder %s49, 0
    %s52 = sadd.s32 %s51, 1
    %s53 = scalar_select %p50, %s51, %s52
    %p56 = pneg %p50
    %p57 = scmp.eq.s32.totalorder %s20, 2
    %p58 = por %p56, %p57
    %p59 = scmp.ne.s32.totalorder %s51, %s54
    %p60 = scmp.eq.s32.totalorder %s20, 0
    %p61 = por %p59, %p60
    %p62 = scmp.ne.s32.totalorder %s51, %s54
    %p63 = scmp.eq.s32.totalorder %s25, 2
    %p64 = por %p62, %p63
    %p65 = scmp.ne.s32.totalorder %s54, %s55
    %p66 = scmp.eq.s32.totalorder %s25, 0
    %p67 = por %p65, %p66
    %p68 = scmp.ne.s32.totalorder %s54, %s55
    %p69 = scmp.eq.s32.totalorder %s26, 2
    %p70 = por %p68, %p69
    %p72 = scmp.ne.s32.totalorder %s55, %s71
    %p73 = scmp.eq.s32.totalorder %s26, 0
    %p74 = por %p72, %p73
    %s75 = ssub.s32 %s20, %s27
    %p76 = scmp.eq.s32.totalorder %s75, 0
    %s78 = sadd.s32 %s77, 1
    %s79 = scalar_select %p76, %s77, %s78
    %p82 = pneg %p76
    %p83 = scmp.eq.s32.totalorder %s20, 2
    %p84 = por %p82, %p83
    %p85 = scmp.ne.s32.totalorder %s77, %s80
    %p86 = scmp.eq.s32.totalorder %s20, 0
    %p87 = por %p85, %p86
    %p88 = scmp.ne.s32.totalorder %s77, %s80
    %p89 = scmp.eq.s32.totalorder %s25, 2
    %p90 = por %p88, %p89
    %p91 = scmp.ne.s32.totalorder %s80, %s81
    %p92 = scmp.eq.s32.totalorder %s25, 0
    %p93 = por %p91, %p92
    %p94 = scmp.ne.s32.totalorder %s80, %s81
    %p95 = scmp.eq.s32.totalorder %s26, 2
    %p96 = por %p94, %p95
    %p98 = scmp.ne.s32.totalorder %s81, %s97
    %p99 = scmp.eq.s32.totalorder %s26, 0
    %p100 = por %p98, %p99
    %s101 = ssub.s32 %s20, %s27
    %p102 = scmp.eq.s32.totalorder %s101, 0
    %s104 = sadd.s32 %s103, 1
    %s105 = scalar_select %p102, %s103, %s104
    %p108 = pneg %p102
    %p109 = scmp.eq.s32.totalorder %s20, 2
    %p110 = por %p108, %p109
    %p111 = scmp.ne.s32.totalorder %s103, %s106
    %p112 = scmp.eq.s32.totalorder %s20, 0
    %p113 = por %p111, %p112
    %p114 = scmp.ne.s32.totalorder %s103, %s106
    %p115 = scmp.eq.s32.totalorder %s25, 2
    %p116 = por %p114, %p115
    %p117 = scmp.ne.s32.totalorder %s106, %s107
    %p118 = scmp.eq.s32.totalorder %s25, 0
    %p119 = por %p117, %p118
    %p120 = scmp.ne.s32.totalorder %s106, %s107
    %p121 = scmp.eq.s32.totalorder %s26, 2
    %p122 = por %p120, %p121
    %p124 = scmp.ne.s32.totalorder %s107, %s123
    %p125 = scmp.eq.s32.totalorder %s26, 0
    %p126 = por %p124, %p125
    %s127 = ssub.s32 %s20, %s27
    %p128 = scmp.eq.s32.totalorder %s127, 0
    %s130 = sadd.s32 %s129, 1
    %s131 = scalar_select %p128, %s129, %s130
    %p134 = pneg %p128
    %p135 = scmp.eq.s32.totalorder %s20, 2
    %p136 = por %p134, %p135
    %p137 = scmp.ne.s32.totalorder %s129, %s132
    %p138 = scmp.eq.s32.totalorder %s20, 0
    %p139 = por %p137, %p138
    %p140 = scmp.ne.s32.totalorder %s129, %s132
    %p141 = scmp.eq.s32.totalorder %s25, 2
    %p142 = por %p140, %p141
    %p143 = scmp.ne.s32.totalorder %s132, %s133
    %p144 = scmp.eq.s32.totalorder %s25, 0
    %p145 = por %p143, %p144
    %p146 = scmp.ne.s32.totalorder %s132, %s133
    %p147 = scmp.eq.s32.totalorder %s26, 2
    %p148 = por %p146, %p147
    %p150 = scmp.ne.s32.totalorder %s133, %s149
    %p151 = scmp.eq.s32.totalorder %s26, 0
    %p152 = por %p150, %p151
    %s153 = ssub.s32 %s20, %s27
    %p154 = scmp.eq.s32.totalorder %s153, 0
    %s156 = sadd.s32 %s155, 1
    %s157 = scalar_select %p154, %s155, %s156
    %p160 = pneg %p154
    %p161 = scmp.eq.s32.totalorder %s20, 2
    %p162 = por %p160, %p161
    %p163 = scmp.ne.s32.totalorder %s155, %s158
    %p164 = scmp.eq.s32.totalorder %s20, 0
    %p165 = por %p163, %p164
    %p166 = scmp.ne.s32.totalorder %s155, %s158
    %p167 = scmp.eq.s32.totalorder %s25, 2
    %p168 = por %p166, %p167
    %p169 = scmp.ne.s32.totalorder %s158, %s159
    %p170 = scmp.eq.s32.totalorder %s25, 0
    %p171 = por %p169, %p170
    %p172 = scmp.ne.s32.totalorder %s158, %s159
    %p173 = scmp.eq.s32.totalorder %s26, 2
    %p174 = por %p172, %p173
    %p176 = scmp.ne.s32.totalorder %s159, %s175
    %p177 = scmp.eq.s32.totalorder %s26, 0
    %p178 = por %p176, %p177
    %s179 = ssub.s32 %s20, %s27
    %p180 = scmp.eq.s32.totalorder %s179, 0
    %s182 = sadd.s32 %s181, 1
    %s183 = scalar_select %p180, %s181, %s182
    %p186 = pneg %p180
    %p187 = scmp.eq.s32.totalorder %s20, 2
    %p188 = por %p186, %p187
    %p189 = scmp.ne.s32.totalorder %s181, %s184
    %p190 = scmp.eq.s32.totalorder %s20, 0
    %p191 = por %p189, %p190
    %p192 = scmp.ne.s32.totalorder %s181, %s184
    %p193 = scmp.eq.s32.totalorder %s25, 2
    %p194 = por %p192, %p193
    %p195 = scmp.ne.s32.totalorder %s184, %s185
    %p196 = scmp.eq.s32.totalorder %s25, 0
    %p197 = por %p195, %p196
    %p198 = scmp.ne.s32.totalorder %s184, %s185
    %p199 = scmp.eq.s32.totalorder %s26, 2
    %p200 = por %p198, %p199
    %p202 = scmp.ne.s32.totalorder %s185, %s201
    %p203 = scmp.eq.s32.totalorder %s26, 0
    %p204 = por %p202, %p203
    %s205 = ssub.s32 %s20, %s27
    %p206 = scmp.eq.s32.totalorder %s205, 0
    %s208 = sadd.s32 %s207, 1
    %s209 = scalar_select %p206, %s207, %s208
    %p212 = pneg %p206
    %p213 = scmp.eq.s32.totalorder %s20, 2
    %p214 = por %p212, %p213
    %p215 = scmp.ne.s32.totalorder %s207, %s210
    %p216 = scmp.eq.s32.totalorder %s20, 0
    %p217 = por %p215, %p216
    %p218 = scmp.ne.s32.totalorder %s207, %s210
    %p219 = scmp.eq.s32.totalorder %s25, 2
    %p220 = por %p218, %p219
    %p221 = scmp.ne.s32.totalorder %s210, %s211
    %p222 = scmp.eq.s32.totalorder %s25, 0
    %p223 = por %p221, %p222
    %p224 = scmp.ne.s32.totalorder %s210, %s211
    %p225 = scmp.eq.s32.totalorder %s26, 2
    %p226 = por %p224, %p225
    %p228 = scmp.ne.s32.totalorder %s211, %s227
    %p229 = scmp.eq.s32.totalorder %s26, 0
    %p230 = por %p228, %p229
    %s231 = ssub.s32 %s20, %s27
    %p232 = scmp.eq.s32.totalorder %s231, 0
    %s234 = sadd.s32 %s233, 1
    %s235 = scalar_select %p232, %s233, %s234
    %p238 = pneg %p232
    %p239 = scmp.eq.s32.totalorder %s20, 2
    %p240 = por %p238, %p239
    %p241 = scmp.ne.s32.totalorder %s233, %s236
    %p242 = scmp.eq.s32.totalorder %s20, 0
    %p243 = por %p241, %p242
    %p244 = scmp.ne.s32.totalorder %s233, %s236
    %p245 = scmp.eq.s32.totalorder %s25, 2
    %p246 = por %p244, %p245
    %p247 = scmp.ne.s32.totalorder %s236, %s237
    %p248 = scmp.eq.s32.totalorder %s25, 0
    %p249 = por %p247, %p248
    %p250 = scmp.ne.s32.totalorder %s236, %s237
    %p251 = scmp.eq.s32.totalorder %s26, 2
    %p252 = por %p250, %p251
    %p254 = scmp.ne.s32.totalorder %s237, %s253
    %p255 = scmp.eq.s32.totalorder %s26, 0
    %p256 = por %p254, %p255
    %s257 = ssub.s32 %s20, %s27
    %p258 = scmp.eq.s32.totalorder %s257, 0
    %s260 = sadd.s32 %s259, 1
    %s261 = scalar_select %p258, %s259, %s260
    %p264 = pneg %p258
    %p265 = scmp.eq.s32.totalorder %s20, 2
    %p266 = por %p264, %p265
    %p267 = scmp.ne.s32.totalorder %s259, %s262
    %p268 = scmp.eq.s32.totalorder %s20, 0
    %p269 = por %p267, %p268
    %p270 = scmp.ne.s32.totalorder %s259, %s262
    %p271 = scmp.eq.s32.totalorder %s25, 2
    %p272 = por %p270, %p271
    %p273 = scmp.ne.s32.totalorder %s262, %s263
    %p274 = scmp.eq.s32.totalorder %s25, 0
    %p275 = por %p273, %p274
    %p276 = scmp.ne.s32.totalorder %s262, %s263
    %p277 = scmp.eq.s32.totalorder %s26, 2
    %p278 = por %p276, %p277
    %p280 = scmp.ne.s32.totalorder %s263, %s279
    %p281 = scmp.eq.s32.totalorder %s26, 0
    %p282 = por %p280, %p281
    %s283 = ssub.s32 %s20, %s27
    %p284 = scmp.eq.s32.totalorder %s283, 0
    %s286 = sadd.s32 %s285, 1
    %s287 = scalar_select %p284, %s285, %s286
    %p290 = pneg %p284
    %p291 = scmp.eq.s32.totalorder %s20, 2
    %p292 = por %p290, %p291
    %p293 = scmp.ne.s32.totalorder %s285, %s288
    %p294 = scmp.eq.s32.totalorder %s20, 0
    %p295 = por %p293, %p294
    %p296 = scmp.ne.s32.totalorder %s285, %s288
    %p297 = scmp.eq.s32.totalorder %s25, 2
    %p298 = por %p296, %p297
    %p299 = scmp.ne.s32.totalorder %s288, %s289
    %p300 = scmp.eq.s32.totalorder %s25, 0
    %p301 = por %p299, %p300
    %p302 = scmp.ne.s32.totalorder %s288, %s289
    %p303 = scmp.eq.s32.totalorder %s26, 2
    %p304 = por %p302, %p303
    %p306 = scmp.ne.s32.totalorder %s289, %s305
    %p307 = scmp.eq.s32.totalorder %s26, 0
    %p308 = por %p306, %p307
    %s309 = ssub.s32 %s20, %s27
    %p310 = scmp.eq.s32.totalorder %s309, 0
    %s312 = sadd.s32 %s311, 1
    %s313 = scalar_select %p310, %s311, %s312
    %p316 = pneg %p310
    %p317 = scmp.eq.s32.totalorder %s20, 2
    %p318 = por %p316, %p317
    %p319 = scmp.ne.s32.totalorder %s311, %s314
    %p320 = scmp.eq.s32.totalorder %s20, 0
    %p321 = por %p319, %p320
    %p322 = scmp.ne.s32.totalorder %s311, %s314
    %p323 = scmp.eq.s32.totalorder %s25, 2
    %p324 = por %p322, %p323
    %p325 = scmp.ne.s32.totalorder %s314, %s315
    %p326 = scmp.eq.s32.totalorder %s25, 0
    %p327 = por %p325, %p326
    %p328 = scmp.ne.s32.totalorder %s314, %s315
    %p329 = scmp.eq.s32.totalorder %s26, 2
    %p330 = por %p328, %p329
    %p332 = scmp.ne.s32.totalorder %s315, %s331
    %p333 = scmp.eq.s32.totalorder %s26, 0
    %p334 = por %p332, %p333
    %s335 = ssub.s32 %s20, %s27
    %p336 = scmp.eq.s32.totalorder %s335, 0
    %s338 = sadd.s32 %s337, 1
    %s339 = scalar_select %p336, %s337, %s338
    %p342 = pneg %p336
    %p343 = scmp.eq.s32.totalorder %s20, 2
    %p344 = por %p342, %p343
    %p345 = scmp.ne.s32.totalorder %s337, %s340
    %p346 = scmp.eq.s32.totalorder %s20, 0
    %p347 = por %p345, %p346
    %p348 = scmp.ne.s32.totalorder %s337, %s340
    %p349 = scmp.eq.s32.totalorder %s25, 2
    %p350 = por %p348, %p349
    %p351 = scmp.ne.s32.totalorder %s340, %s341
    %p352 = scmp.eq.s32.totalorder %s25, 0
    %p353 = por %p351, %p352
    %p354 = scmp.ne.s32.totalorder %s340, %s341
    %p355 = scmp.eq.s32.totalorder %s26, 2
    %p356 = por %p354, %p355
    %p358 = scmp.ne.s32.totalorder %s341, %s357
    %p359 = scmp.eq.s32.totalorder %s26, 0
    %p360 = por %p358, %p359
    %s361 = ssub.s32 %s20, %s27
    %p362 = scmp.eq.s32.totalorder %s361, 0
    %s364 = sadd.s32 %s363, 1
    %s365 = scalar_select %p362, %s363, %s364
    %p368 = pneg %p362
    %p369 = scmp.eq.s32.totalorder %s20, 2
    %p370 = por %p368, %p369
    %p371 = scmp.ne.s32.totalorder %s363, %s366
    %p372 = scmp.eq.s32.totalorder %s20, 0
    %p373 = por %p371, %p372
    %p374 = scmp.ne.s32.totalorder %s363, %s366
    %p375 = scmp.eq.s32.totalorder %s25, 2
    %p376 = por %p374, %p375
    %p377 = scmp.ne.s32.totalorder %s366, %s367
    %p378 = scmp.eq.s32.totalorder %s25, 0
    %p379 = por %p377, %p378
    %p380 = scmp.ne.s32.totalorder %s366, %s367
    %p381 = scmp.eq.s32.totalorder %s26, 2
    %p382 = por %p380, %p381
    %p384 = scmp.ne.s32.totalorder %s367, %s383
    %p385 = scmp.eq.s32.totalorder %s26, 0
    %p386 = por %p384, %p385
    %s387 = ssub.s32 %s20, %s27
    %p388 = scmp.eq.s32.totalorder %s387, 0
    %s390 = sadd.s32 %s389, 1
    %s391 = scalar_select %p388, %s389, %s390
    %p394 = pneg %p388
    %p395 = scmp.eq.s32.totalorder %s20, 2
    %p396 = por %p394, %p395
    %p397 = scmp.ne.s32.totalorder %s389, %s392
    %p398 = scmp.eq.s32.totalorder %s20, 0
    %p399 = por %p397, %p398
    %p400 = scmp.ne.s32.totalorder %s389, %s392
    %p401 = scmp.eq.s32.totalorder %s25, 2
    %p402 = por %p400, %p401
    %p403 = scmp.ne.s32.totalorder %s392, %s393
    %p404 = scmp.eq.s32.totalorder %s25, 0
    %p405 = por %p403, %p404
    %p406 = scmp.ne.s32.totalorder %s392, %s393
    %p407 = scmp.eq.s32.totalorder %s26, 2
    %p408 = por %p406, %p407
    %p410 = scmp.ne.s32.totalorder %s393, %s409
    %p411 = scmp.eq.s32.totalorder %s26, 0
    %p412 = por %p410, %p411
    %p413 = scmp.le.s32.totalorder 1, %s20
    %p414 = scmp.lt.s32.totalorder %s20, 4
    %p415 = pnand %p413, %p414
    %p416 = pneg %p415
    // Predicated region
    $region9: #{gat_forward.1} parent=5 // pred_check
      _
    $region10: #{gat_forward.1} parent=5 // pred_check_branch
      %418 = sbr.rel (%p415) target = $region12
    $region11: #{gat_forward.1} parent=5 // pred_region
      %s419 = ssub.s32 %s20, 1
      // Predicated region
      $region13: #{gat_forward.1} parent=11 // pred_check
        %p420 = pneg %p41
      $region14: #{gat_forward.1} parent=11 // pred_check_branch
        %422 = sbr.rel (%p420) target = $region16
      $region15: #{gat_forward.1} parent=11 // pred_region
        _
      $region16: #{gat_forward.1} parent=11 // pred_fallthru
        _
    $region12: #{gat_forward.1} parent=5 // pred_fallthru
      _
    %p423 = scmp.lt.s32.totalorder %s20, 3
    // Predicated region
    $region17: #{gat_forward.1} parent=5 // pred_check
      %p424 = pneg %p423
    $region18: #{gat_forward.1} parent=5 // pred_check_branch
      %426 = sbr.rel (%p424) target = $region20
    $region19: #{gat_forward.1} parent=5 // pred_region
      // Predicated region
      $region21: #{gat_forward.1} parent=19 // pred_check
        %p427 = pneg %p61
      $region22: #{gat_forward.1} parent=19 // pred_check_branch
        %429 = sbr.rel (%p427) target = $region24
      $region23: #{gat_forward.1} parent=19 // pred_region
        %p430 = scmp.lt.s32.totalorder %s20, 2
        %s431 = scalar_select %p430, %s20, 2
        %s432 = smul.addr %s431, 2
        %s433 = smul.addr %s432, 8
        %s434 = scalar_lea.vmem %s1, %s433
      $region24: #{gat_forward.1} parent=19 // pred_fallthru
        _
      // Predicated region
      $region25: #{gat_forward.1} parent=19 // pred_check
        %p435 = pneg %p87
      $region26: #{gat_forward.1} parent=19 // pred_check_branch
        %437 = sbr.rel (%p435) target = $region28
      $region27: #{gat_forward.1} parent=19 // pred_region
        %p438 = scmp.lt.s32.totalorder %s20, 2
        %s439 = scalar_select %p438, %s20, 2
        %s440 = smul.addr %s439, 2
        %s441 = smul.addr %s440, 8
        %s442 = scalar_lea.vmem %s2, %s441
      $region28: #{gat_forward.1} parent=19 // pred_fallthru
        _
      // Predicated region
      $region29: #{gat_forward.1} parent=19 // pred_check
        %p443 = pneg %p113
      $region30: #{gat_forward.1} parent=19 // pred_check_branch
        %445 = sbr.rel (%p443) target = $region32
      $region31: #{gat_forward.1} parent=19 // pred_region
        %p446 = scmp.lt.s32.totalorder %s20, 2
        %s447 = scalar_select %p446, %s20, 2
        %s448 = scalar_lea.vmem %s3, %s447
      $region32: #{gat_forward.1} parent=19 // pred_fallthru
        _
      // Predicated region
      $region33: #{gat_forward.1} parent=19 // pred_check
        %p449 = pneg %p139
      $region34: #{gat_forward.1} parent=19 // pred_check_branch
        %451 = sbr.rel (%p449) target = $region36
      $region35: #{gat_forward.1} parent=19 // pred_region
        %p452 = scmp.lt.s32.totalorder %s20, 2
        %s453 = scalar_select %p452, %s20, 2
        %s454 = smul.addr %s453, 4
        %s455 = smul.addr %s454, 8
        %s456 = scalar_lea.vmem %s4, %s455
      $region36: #{gat_forward.1} parent=19 // pred_fallthru
        _
      // Predicated region
      $region37: #{gat_forward.1} parent=19 // pred_check
        %p457 = pneg %p165
      $region38: #{gat_forward.1} parent=19 // pred_check_branch
        %459 = sbr.rel (%p457) target = $region40
      $region39: #{gat_forward.1} parent=19 // pred_region
        %p460 = scmp.lt.s32.totalorder %s20, 2
        %s461 = scalar_select %p460, %s20, 2
        %s462 = scalar_lea.vmem %s5, %s461
      $region40: #{gat_forward.1} parent=19 // pred_fallthru
        _
      // Predicated region
      $region41: #{gat_forward.1} parent=19 // pred_check
        %p463 = pneg %p191
      $region42: #{gat_forward.1} parent=19 // pred_check_branch
        %465 = sbr.rel (%p463) target = $region44
      $region43: #{gat_forward.1} parent=19 // pred_region
        %p466 = scmp.lt.s32.totalorder %s20, 2
        %s467 = scalar_select %p466, %s20, 2
        %s468 = smul.addr %s467, 4
        %s469 = smul.addr %s468, 8
        %s470 = scalar_lea.vmem %s6, %s469
      $region44: #{gat_forward.1} parent=19 // pred_fallthru
        _
      // Predicated region
      $region45: #{gat_forward.1} parent=19 // pred_check
        %p471 = pneg %p217
      $region46: #{gat_forward.1} parent=19 // pred_check_branch
        %473 = sbr.rel (%p471) target = $region48
      $region47: #{gat_forward.1} parent=19 // pred_region
        %p474 = scmp.lt.s32.totalorder %s20, 2
        %s475 = scalar_select %p474, %s20, 2
        %s476 = scalar_lea.vmem %s7, %s475
      $region48: #{gat_forward.1} parent=19 // pred_fallthru
        _
      // Predicated region
      $region49: #{gat_forward.1} parent=19 // pred_check
        %p477 = pneg %p243
      $region50: #{gat_forward.1} parent=19 // pred_check_branch
        %479 = sbr.rel (%p477) target = $region52
      $region51: #{gat_forward.1} parent=19 // pred_region
        %p480 = scmp.lt.s32.totalorder %s20, 2
        %s481 = scalar_select %p480, %s20, 2
        %s482 = smul.addr %s481, 4
        %s483 = smul.addr %s482, 8
        %s484 = scalar_lea.vmem %s8, %s483
      $region52: #{gat_forward.1} parent=19 // pred_fallthru
        _
      // Predicated region
      $region53: #{gat_forward.1} parent=19 // pred_check
        %p485 = pneg %p269
      $region54: #{gat_forward.1} parent=19 // pred_check_branch
        %487 = sbr.rel (%p485) target = $region56
      $region55: #{gat_forward.1} parent=19 // pred_region
        %p488 = scmp.lt.s32.totalorder %s20, 2
        %s489 = scalar_select %p488, %s20, 2
        %s490 = scalar_lea.vmem %s9, %s489
      $region56: #{gat_forward.1} parent=19 // pred_fallthru
        _
      // Predicated region
      $region57: #{gat_forward.1} parent=19 // pred_check
        %p491 = pneg %p295
      $region58: #{gat_forward.1} parent=19 // pred_check_branch
        %493 = sbr.rel (%p491) target = $region60
      $region59: #{gat_forward.1} parent=19 // pred_region
        %p494 = scmp.lt.s32.totalorder %s20, 2
        %s495 = scalar_select %p494, %s20, 2
        %s496 = smul.addr %s495, 4
        %s497 = smul.addr %s496, 8
        %s498 = scalar_lea.vmem %s10, %s497
      $region60: #{gat_forward.1} parent=19 // pred_fallthru
        _
      // Predicated region
      $region61: #{gat_forward.1} parent=19 // pred_check
        %p499 = pneg %p321
      $region62: #{gat_forward.1} parent=19 // pred_check_branch
        %501 = sbr.rel (%p499) target = $region64
      $region63: #{gat_forward.1} parent=19 // pred_region
        %p502 = scmp.lt.s32.totalorder %s20, 2
        %s503 = scalar_select %p502, %s20, 2
        %s504 = scalar_lea.vmem %s11, %s503
      $region64: #{gat_forward.1} parent=19 // pred_fallthru
        _
      // Predicated region
      $region65: #{gat_forward.1} parent=19 // pred_check
        %p505 = pneg %p347
      $region66: #{gat_forward.1} parent=19 // pred_check_branch
        %507 = sbr.rel (%p505) target = $region68
      $region67: #{gat_forward.1} parent=19 // pred_region
        %p508 = scmp.lt.s32.totalorder %s20, 2
        %s509 = scalar_select %p508, %s20, 2
        %s510 = smul.addr %s509, 8
        %s511 = scalar_lea.vmem %s12, %s510
      $region68: #{gat_forward.1} parent=19 // pred_fallthru
        _
      // Predicated region
      $region69: #{gat_forward.1} parent=19 // pred_check
        %p512 = pneg %p373
      $region70: #{gat_forward.1} parent=19 // pred_check_branch
        %514 = sbr.rel (%p512) target = $region72
      $region71: #{gat_forward.1} parent=19 // pred_region
        %p515 = scmp.lt.s32.totalorder %s20, 2
        %s516 = scalar_select %p515, %s20, 2
        %s517 = scalar_lea.vmem %s13, %s516
      $region72: #{gat_forward.1} parent=19 // pred_fallthru
        _
    $region20: #{gat_forward.1} parent=5 // pred_fallthru
      _
    %p518 = scmp.le.s32.totalorder 1, %s20
    %p519 = scmp.lt.s32.totalorder %s20, 4
    %p520 = pnand %p518, %p519
    %p521 = pneg %p520
    // Predicated region
    $region73: #{gat_forward.1} parent=5 // pred_check
      _
    $region74: #{gat_forward.1} parent=5 // pred_check_branch
      %523 = sbr.rel (%p520) target = $region76
    $region75: #{gat_forward.1} parent=5 // pred_region
      %s524 = ssub.s32 %s20, 1
      %p525 = pneg %p41
      %p526 = pneg %p38
      %p527 = scmp.lt.s32.totalorder %s25, 2
      %s528 = scalar_select %p527, %s25, 2
      %s529 = smul.addr %s528, 2
      %s530 = smul.addr %s529, 8
      %s531 = scalar_lea.vmem %s1, %s530
      %p532 = pneg %p67
      %p533 = pneg %p64
      %p534 = scmp.lt.s32.totalorder %s25, 2
      %s535 = scalar_select %p534, %s25, 2
      %s536 = smul.addr %s535, 2
      %s537 = smul.addr %s536, 8
      %s538 = scalar_lea.vmem %s2, %s537
      %p539 = pneg %p93
      %p540 = pneg %p90
      %p541 = scmp.lt.s32.totalorder %s25, 2
      %s542 = scalar_select %p541, %s25, 2
      %s543 = scalar_lea.vmem %s3, %s542
      %p544 = pneg %p119
      %p545 = pneg %p116
      %p546 = scmp.lt.s32.totalorder %s25, 2
      %s547 = scalar_select %p546, %s25, 2
      %s548 = smul.addr %s547, 4
      %s549 = smul.addr %s548, 8
      %s550 = scalar_lea.vmem %s4, %s549
      %p551 = pneg %p145
      %p552 = pneg %p142
      %p553 = scmp.lt.s32.totalorder %s25, 2
      %s554 = scalar_select %p553, %s25, 2
      %s555 = scalar_lea.vmem %s5, %s554
      %p556 = pneg %p171
      %p557 = pneg %p168
      %p558 = scmp.lt.s32.totalorder %s25, 2
      %s559 = scalar_select %p558, %s25, 2
      %s560 = smul.addr %s559, 4
      %s561 = smul.addr %s560, 8
      %s562 = scalar_lea.vmem %s6, %s561
      %p563 = pneg %p197
      %p564 = pneg %p194
      %p565 = scmp.lt.s32.totalorder %s25, 2
      %s566 = scalar_select %p565, %s25, 2
      %s567 = scalar_lea.vmem %s7, %s566
      %p568 = pneg %p223
      %p569 = pneg %p220
      %p570 = scmp.lt.s32.totalorder %s25, 2
      %s571 = scalar_select %p570, %s25, 2
      %s572 = smul.addr %s571, 4
      %s573 = smul.addr %s572, 8
      %s574 = scalar_lea.vmem %s8, %s573
      %p575 = pneg %p249
      %p576 = pneg %p246
      %p577 = scmp.lt.s32.totalorder %s25, 2
      %s578 = scalar_select %p577, %s25, 2
      %s579 = scalar_lea.vmem %s9, %s578
      %p580 = pneg %p275
      %p581 = pneg %p272
      %p582 = scmp.lt.s32.totalorder %s25, 2
      %s583 = scalar_select %p582, %s25, 2
      %s584 = smul.addr %s583, 4
      %s585 = smul.addr %s584, 8
      %s586 = scalar_lea.vmem %s10, %s585
      %p587 = pneg %p301
      %p588 = pneg %p298
      %p589 = scmp.lt.s32.totalorder %s25, 2
      %s590 = scalar_select %p589, %s25, 2
      %s591 = scalar_lea.vmem %s11, %s590
      %p592 = pneg %p327
      %p593 = pneg %p324
      %p594 = scmp.lt.s32.totalorder %s25, 2
      %s595 = scalar_select %p594, %s25, 2
      %s596 = smul.addr %s595, 8
      %s597 = scalar_lea.vmem %s12, %s596
      %p598 = pneg %p353
      %p599 = pneg %p350
      %p600 = scmp.lt.s32.totalorder %s25, 2
      %s601 = scalar_select %p600, %s25, 2
      %s602 = scalar_lea.vmem %s13, %s601
      %p603 = pneg %p379
      %p604 = pneg %p376
      %p605 = pneg %p405
      %p606 = pneg %p402
      %p607 = scmp.lt.s32.totalorder %s25, 2
      %s608 = scalar_select %p607, %s25, 2
      %s609 = smul.addr %s608, 4
      %s610 = smul.addr %s609, 8
      %s611 = scalar_lea.vmem %s14, %s610
      %p612 = scmp.lt.s32.totalorder %s25, 2
      %s613 = scalar_select %p612, %s25, 2
      %s614 = smul.addr %s613, 2
      %s615 = smul.addr %s614, 8
      %s616 = scalar_lea.vmem %s1, %s615
      %p617 = scmp.lt.s32.totalorder %s25, 2
      %s618 = scalar_select %p617, %s25, 2
      %s619 = smul.addr %s618, 2
      %s620 = smul.addr %s619, 8
      %s621 = scalar_lea.vmem %s2, %s620
      %p622 = scmp.lt.s32.totalorder %s25, 2
      %s623 = scalar_select %p622, %s25, 2
      %s624 = scalar_lea.vmem %s3, %s623
      %p625 = scmp.lt.s32.totalorder %s25, 2
      %s626 = scalar_select %p625, %s25, 2
      %s627 = smul.addr %s626, 4
      %s628 = smul.addr %s627, 8
      %s629 = scalar_lea.vmem %s4, %s628
      %p630 = scmp.lt.s32.totalorder %s25, 2
      %s631 = scalar_select %p630, %s25, 2
      %s632 = scalar_lea.vmem %s5, %s631
      %p633 = scmp.lt.s32.totalorder %s25, 2
      %s634 = scalar_select %p633, %s25, 2
      %s635 = smul.addr %s634, 4
      %s636 = smul.addr %s635, 8
      %s637 = scalar_lea.vmem %s6, %s636
      %p638 = scmp.lt.s32.totalorder %s25, 2
      %s639 = scalar_select %p638, %s25, 2
      %s640 = scalar_lea.vmem %s7, %s639
      %p641 = scmp.lt.s32.totalorder %s25, 2
      %s642 = scalar_select %p641, %s25, 2
      %s643 = smul.addr %s642, 4
      %s644 = smul.addr %s643, 8
      %s645 = scalar_lea.vmem %s8, %s644
      %p646 = scmp.lt.s32.totalorder %s25, 2
      %s647 = scalar_select %p646, %s25, 2
      %s648 = scalar_lea.vmem %s9, %s647
      %p649 = scmp.lt.s32.totalorder %s25, 2
      %s650 = scalar_select %p649, %s25, 2
      %s651 = smul.addr %s650, 4
      %s652 = smul.addr %s651, 8
      %s653 = scalar_lea.vmem %s10, %s652
      %p654 = scmp.lt.s32.totalorder %s25, 2
      %s655 = scalar_select %p654, %s25, 2
      %s656 = scalar_lea.vmem %s11, %s655
      %p657 = scmp.lt.s32.totalorder %s25, 2
      %s658 = scalar_select %p657, %s25, 2
      %s659 = smul.addr %s658, 8
      %s660 = scalar_lea.vmem %s12, %s659
      %p661 = scmp.lt.s32.totalorder %s25, 2
      %s662 = scalar_select %p661, %s25, 2
      %s663 = scalar_lea.vmem %s13, %s662
      %p664 = scmp.lt.s32.totalorder %s25, 2
      %s665 = scalar_select %p664, %s25, 2
      %s666 = smul.addr %s665, 4
      %s667 = smul.addr %s666, 8
      %s668 = scalar_lea.vmem %s14, %s667
      %v669 = vld [vmem:[%s616] sm:$0xff]
      %v670 = vld [vmem:[%s616 + $0x8] sm:$0xff]
      %vm671 = vcmp.gt.f32.partialorder %v669, 0.0
      %vm672 = vcmp.gt.f32.partialorder %v670, 0.0
      %v673 = vld [vmem:[%s0] sm:$0xff]
      %v674 = vld [vmem:[%s0 + $0x8] sm:$0xff]
      %v675 = vld [vmem:[%s0 + $0x10] sm:$0xff]
      %v676 = vld [vmem:[%s0 + $0x18] sm:$0xff]
      %v677 = vld [vmem:[%s621] sm:$0xff]
      %v678 = vld [vmem:[%s621 + $0x8] sm:$0xff]
      %v679 = vld [vmem:[%s624] sm:$0x1]
      %v681 = vlaneseq
      %v682 = vshrl.u32 %v681, 7
      %v683 = vsub.s32 0, %v682
      %v684 = vrot.slane %v679, %v683
      %vm686 = vcmask 130048
      %v688 = vsel %vm686, %v673, 0
      %v691 = vsel %vm686, %v674, 0
      %v694 = vsel %vm686, %v675, 0
      %v697 = vsel %vm686, %v676, 0
      %699 = vmatprep.subr.mxu0 0.0
      %700 = vmatpush1.msra.mxu0 %v677
      %701 = vmatprep.subr.mxu0 0.0
      %702 = vmatpush1.msra.mxu0 %v678
      %703 = vmatprep.subr.mxu0 0.0
      %704 = vmatpush1.msra.mxu0 0.0
      %705 = vmatprep.subr.mxu0 0.0
      %706 = vmatpush1.msra.mxu0 0.0
      %707 = vmatprep.subr.mxu0 0.0
      %708 = vmatpush1.msra.mxu0 0.0
      %709 = vmatprep.subr.mxu0 0.0
      %710 = vmatpush1.msra.mxu0 0.0
      %711 = vmatprep.subr.mxu0 0.0
      %712 = vmatpush1.msra.mxu0 0.0
      %713 = vmatprep.subr.mxu0 0.0
      %714 = vmatpush1.msra.mxu0 0.0
      %715 = vmatprep.subr.mxu0 0.0
      %716 = vmatpush1.msra.mxu0 0.0
      %717 = vmatprep.subr.mxu0 0.0
      %718 = vmatpush1.msra.mxu0 0.0
      %719 = vmatprep.subr.mxu0 0.0
      %720 = vmatpush1.msra.mxu0 0.0
      %721 = vmatprep.subr.mxu0 0.0
      %722 = vmatpush1.msra.mxu0 0.0
      %723 = vmatprep.subr.mxu0 0.0
      %724 = vmatpush1.msra.mxu0 0.0
      %725 = vmatprep.subr.mxu0 0.0
      %726 = vmatpush1.msra.mxu0 0.0
      %727 = vmatprep.subr.mxu0 0.0
      %728 = vmatpush1.msra.mxu0 0.0
      %729 = vmatprep.subr.mxu0 0.0
      %730 = vmatpush1.msra.mxu0 0.0
      %731 = vmatprep.subr.mxu0 0.0
      %732 = vmatpush1.msra.mxu0 0.0
      %733 = vmatprep.subr.mxu0 0.0
      %734 = vmatpush1.msra.mxu0 0.0
      %735 = vmatprep.subr.mxu0 0.0
      %736 = vmatpush1.msra.mxu0 0.0
      %737 = vmatprep.subr.mxu0 0.0
      %738 = vmatpush1.msra.mxu0 0.0
      %739 = vmatprep.subr.mxu0 0.0
      %740 = vmatpush1.msra.mxu0 0.0
      %741 = vmatprep.subr.mxu0 0.0
      %742 = vmatpush1.msra.mxu0 0.0
      %743 = vmatprep.subr.mxu0 0.0
      %744 = vmatpush1.msra.mxu0 0.0
      %745 = vmatprep.subr.mxu0 0.0
      %746 = vmatpush1.msra.mxu0 0.0
      %747 = vmatprep.subr.mxu0 0.0
      %748 = vmatpush1.msra.mxu0 0.0
      %749 = vmatprep.subr.mxu0 0.0
      %750 = vmatpush1.msra.mxu0 0.0
      %751 = vmatprep.subr.mxu0 0.0
      %752 = vmatpush1.msra.mxu0 0.0
      %753 = vmatprep.subr.mxu0 0.0
      %754 = vmatpush1.msra.mxu0 0.0
      %755 = vmatprep.subr.mxu0 0.0
      %756 = vmatpush1.msra.mxu0 0.0
      %757 = vmatprep.subr.mxu0 0.0
      %758 = vmatpush1.msra.mxu0 0.0
      %759 = vmatprep.subr.mxu0 0.0
      %760 = vmatpush1.msra.mxu0 0.0
      %761 = vmatprep.subr.mxu0 0.0
      %762 = vmatpush1.msra.mxu0 0.0
      %763 = vmatprep.mubr.f32.mxu0 0.0
      %764 = vmatmul.mubr.f32.gmra.mrb[0].mxu0 %v688
      %v765 = vpop.f32.mrb[0].mxu0
      %v766 = vadd.f32 %v684, %v765
      %v767 = vpop.f32.mrb[0].mxu0
      %768 = vmatprep.mubr.f32.mxu0 0.0
      %769 = vmatmul.mubr.f32.gmra.mrb[0].mxu0 %v691
      %v770 = vpop.f32.mrb[0].mxu0
      %v771 = vadd.f32 %v684, %v770
      %v772 = vpop.f32.mrb[0].mxu0
      %773 = vmatprep.mubr.f32.mxu0 0.0
      %774 = vmatmul.mubr.f32.gmra.mrb[0].mxu0 %v694
      %v775 = vpop.f32.mrb[0].mxu0
      %v776 = vadd.f32 %v684, %v775
      %v777 = vpop.f32.mrb[0].mxu0
      %778 = vmatprep.mubr.f32.mxu0 0.0
      %779 = vmatmul.mubr.f32.gmra.mrb[0].mxu0 %v697
      %v780 = vpop.f32.mrb[0].mxu0
      %v781 = vadd.f32 %v684, %v780
      %v782 = vpop.f32.mrb[0].mxu0
      %783 = vdwg.mxu0
      %vm784 = vcmp.ge.f32.partialorder %v766, 0.0
      %vm785 = vcmp.ge.f32.partialorder %v771, 0.0
      %vm786 = vcmp.ge.f32.partialorder %v776, 0.0
      %vm787 = vcmp.ge.f32.partialorder %v781, 0.0
      %v788 = vmul.f32 %v766, 0.2
      %v789 = vmul.f32 %v771, 0.2
      %v790 = vmul.f32 %v776, 0.2
      %v791 = vmul.f32 %v781, 0.2
      %v792 = vsel %vm784, %v766, %v788
      %v793 = vsel %vm785, %v771, %v789
      %v794 = vsel %vm786, %v776, %v790
      %v795 = vsel %vm787, %v781, %v791
      %v796 = vld [vmem:[%s629] sm:$0xff]
      %v797 = vld [vmem:[%s629 + $0x8] sm:$0xff]
      %v798 = vld [vmem:[%s629 + $0x10] sm:$0xff]
      %v799 = vld [vmem:[%s629 + $0x18] sm:$0xff]
      %v800 = vld [vmem:[%s632] sm:$0x1]
      %v802 = vlaneseq
      %v803 = vshrl.u32 %v802, 7
      %v804 = vsub.s32 0, %v803
      %v805 = vrot.slane %v800, %v804
      %vm807 = vcmask 261120
      %v809 = vsel %vm807, %v792, 0
      %v812 = vsel %vm807, %v793, 0
      %v815 = vsel %vm807, %v794, 0
      %v818 = vsel %vm807, %v795, 0
      %820 = vmatprep.subr.mxu0 0.0
      %821 = vmatpush1.msra.mxu0 %v796
      %822 = vmatprep.subr.mxu0 0.0
      %823 = vmatpush1.msra.mxu0 %v797
      %824 = vmatprep.subr.mxu0 0.0
      %825 = vmatpush1.msra.mxu0 %v798
      %826 = vmatprep.subr.mxu0 0.0
      %827 = vmatpush1.msra.mxu0 %v799
      %828 = vmatprep.subr.mxu0 0.0
      %829 = vmatpush1.msra.mxu0 0.0
      %830 = vmatprep.subr.mxu0 0.0
      %831 = vmatpush1.msra.mxu0 0.0
      %832 = vmatprep.subr.mxu0 0.0
      %833 = vmatpush1.msra.mxu0 0.0
      %834 = vmatprep.subr.mxu0 0.0
      %835 = vmatpush1.msra.mxu0 0.0
      %836 = vmatprep.subr.mxu0 0.0
      %837 = vmatpush1.msra.mxu0 0.0
      %838 = vmatprep.subr.mxu0 0.0
      %839 = vmatpush1.msra.mxu0 0.0
      %840 = vmatprep.subr.mxu0 0.0
      %841 = vmatpush1.msra.mxu0 0.0
      %842 = vmatprep.subr.mxu0 0.0
      %843 = vmatpush1.msra.mxu0 0.0
      %844 = vmatprep.subr.mxu0 0.0
      %845 = vmatpush1.msra.mxu0 0.0
      %846 = vmatprep.subr.mxu0 0.0
      %847 = vmatpush1.msra.mxu0 0.0
      %848 = vmatprep.subr.mxu0 0.0
      %849 = vmatpush1.msra.mxu0 0.0
      %850 = vmatprep.subr.mxu0 0.0
      %851 = vmatpush1.msra.mxu0 0.0
      %852 = vmatprep.subr.mxu0 0.0
      %853 = vmatpush1.msra.mxu0 0.0
      %854 = vmatprep.subr.mxu0 0.0
      %855 = vmatpush1.msra.mxu0 0.0
      %856 = vmatprep.subr.mxu0 0.0
      %857 = vmatpush1.msra.mxu0 0.0
      %858 = vmatprep.subr.mxu0 0.0
      %859 = vmatpush1.msra.mxu0 0.0
      %860 = vmatprep.subr.mxu0 0.0
      %861 = vmatpush1.msra.mxu0 0.0
      %862 = vmatprep.subr.mxu0 0.0
      %863 = vmatpush1.msra.mxu0 0.0
      %864 = vmatprep.subr.mxu0 0.0
      %865 = vmatpush1.msra.mxu0 0.0
      %866 = vmatprep.subr.mxu0 0.0
      %867 = vmatpush1.msra.mxu0 0.0
      %868 = vmatprep.subr.mxu0 0.0
      %869 = vmatpush1.msra.mxu0 0.0
      %870 = vmatprep.subr.mxu0 0.0
      %871 = vmatpush1.msra.mxu0 0.0
      %872 = vmatprep.subr.mxu0 0.0
      %873 = vmatpush1.msra.mxu0 0.0
      %874 = vmatprep.subr.mxu0 0.0
      %875 = vmatpush1.msra.mxu0 0.0
      %876 = vmatprep.subr.mxu0 0.0
      %877 = vmatpush1.msra.mxu0 0.0
      %878 = vmatprep.subr.mxu0 0.0
      %879 = vmatpush1.msra.mxu0 0.0
      %880 = vmatprep.subr.mxu0 0.0
      %881 = vmatpush1.msra.mxu0 0.0
      %882 = vmatprep.subr.mxu0 0.0
      %883 = vmatpush1.msra.mxu0 0.0
      %884 = vmatprep.mubr.f32.mxu0 0.0
      %885 = vmatmul.mubr.f32.gmra.mrb[0].mxu0 %v809
      %v886 = vpop.f32.mrb[0].mxu0
      %v887 = vadd.f32 %v805, %v886
      %v888 = vpop.f32.mrb[0].mxu0
      %889 = vmatprep.mubr.f32.mxu0 0.0
      %890 = vmatmul.mubr.f32.gmra.mrb[0].mxu0 %v812
      %v891 = vpop.f32.mrb[0].mxu0
      %v892 = vadd.f32 %v805, %v891
      %v893 = vpop.f32.mrb[0].mxu0
      %894 = vmatprep.mubr.f32.mxu0 0.0
      %895 = vmatmul.mubr.f32.gmra.mrb[0].mxu0 %v815
      %v896 = vpop.f32.mrb[0].mxu0
      %v897 = vadd.f32 %v805, %v896
      %v898 = vpop.f32.mrb[0].mxu0
      %899 = vmatprep.mubr.f32.mxu0 0.0
      %900 = vmatmul.mubr.f32.gmra.mrb[0].mxu0 %v818
      %v901 = vpop.f32.mrb[0].mxu0
      %v902 = vadd.f32 %v805, %v901
      %v903 = vpop.f32.mrb[0].mxu0
      %904 = vdwg.mxu0
      %907 = vrot.lane.b32.xlu0 %v887, 127
      %v908 = vpop.permute.xlu0 %907
      %909 = vrot.lane.b32.xlu0 %v892, 127
      %v910 = vpop.permute.xlu0 %909
      %913 = vxpose.xlu0.b32.start [1/16] %v908, 128
      %914 = vxpose.xlu0.b32.cont [2/16] %v910, 128
      %915 = vxpose.xlu0.b32.cont [3/16] 0.0, 128
      %916 = vxpose.xlu0.b32.cont [4/16] 0.0, 128
      %917 = vxpose.xlu0.b32.cont [5/16] 0.0, 128
      %918 = vxpose.xlu0.b32.cont [6/16] 0.0, 128
      %919 = vxpose.xlu0.b32.cont [7/16] 0.0, 128
      %920 = vxpose.xlu0.b32.cont [8/16] 0.0, 128
      %921 = vxpose.xlu0.b32.cont [9/16] 0.0, 128
      %922 = vxpose.xlu0.b32.cont [10/16] 0.0, 128
      %923 = vxpose.xlu0.b32.cont [11/16] 0.0, 128
      %924 = vxpose.xlu0.b32.cont [12/16] 0.0, 128
      %925 = vxpose.xlu0.b32.cont [13/16] 0.0, 128
      %926 = vxpose.xlu0.b32.cont [14/16] 0.0, 128
      %927 = vxpose.xlu0.b32.cont [15/16] 0.0, 128
      %928 = vxpose.xlu0.b32.end [16/16] 0.0, 128
      %v929 = vpop.trf.xlu0
      %v930 = vpop.trf.xlu0
      %v931 = vpop.trf.xlu0
      %v932 = vpop.trf.xlu0
      %v933 = vpop.trf.xlu0
      %v934 = vpop.trf.xlu0
      %v935 = vpop.trf.xlu0
      %v936 = vpop.trf.xlu0
      %v937 = vpop.trf.xlu0
      %v938 = vpop.trf.xlu0
      %v939 = vpop.trf.xlu0
      %v940 = vpop.trf.xlu0
      %v941 = vpop.trf.xlu0
      %v942 = vpop.trf.xlu0
      %v943 = vpop.trf.xlu0
      %v944 = vpop.trf.xlu0
      %945 = vset.pattern.permute.xlu0 0
      %946 = vperm.xlu0 %945, %v887
      %v947 = vpop.permute.xlu0 %946
      %949 = vset.pattern.permute.xlu0 0
      %950 = vperm.xlu0 %949, %v892
      %v951 = vpop.permute.xlu0 %950
      %v953 = vlaneseq
      %v954 = vshrl.u32 %v953, 7
      %v955 = vsub.s32 0, %v954
      %v956 = vrot.slane %v929, %v955
      %v957 = vadd.f32 %v947, %v956
      %v958 = vadd.f32 %v951, %v956
      %vm959 = vcmp.ge.f32.partialorder %v957, 0.0
      %vm960 = vcmp.ge.f32.partialorder %v958, 0.0
      %v961 = vmul.f32 %v957, 0.2
      %v962 = vmul.f32 %v958, 0.2
      %v963 = vsel %vm959, %v957, %v961
      %v964 = vsel %vm960, %v958, %v962
      %v965 = vsub.f32 0.0, %v963
      %v966 = vsub.f32 0.0, %v964
      %v967 = vmul.f32 %v965, 1.442695
      %v968 = vpow.pop %v967
      %v969 = vmul.f32 %v966, 1.442695
      %v970 = vpow.pop %v969
      %v971 = vsel %vm671, %v968, 0.0
      %v972 = vsel %vm672, %v970, 0.0
      %v973 = vsel %vm686, %v971, 0.0
      %974 = vadd.xlane.f32.xlu0 %v973
      %v975 = vpop.xlane.xlu0 %974
      %v976 = vsel %vm686, %v972, 0.0
      %977 = vadd.xlane.f32.xlu0 %v976
      %v978 = vpop.xlane.xlu0 %977
      %v979 = vadd.f32 %v975, 9e-15
      %v980 = vadd.f32 %v978, 9e-15
      %v981 = vrcp.pop %v979
      %v982 = vrcp.pop %v980
      %v984 = vsel %vm686, %v971, 0
      %v987 = vsel %vm686, %v972, 0
      %989 = vmatprep.subr.mxu0 0.0
      %990 = vmatpush1.msra.mxu0 %v792
      %991 = vmatprep.subr.mxu0 0.0
      %992 = vmatpush1.msra.mxu0 %v793
      %993 = vmatprep.subr.mxu0 0.0
      %994 = vmatpush1.msra.mxu0 0.0
      %995 = vmatprep.subr.mxu0 0.0
      %996 = vmatpush1.msra.mxu0 0.0
      %997 = vmatprep.subr.mxu0 0.0
      %998 = vmatpush1.msra.mxu0 0.0
      %999 = vmatprep.subr.mxu0 0.0
      %1000 = vmatpush1.msra.mxu0 0.0
      %1001 = vmatprep.subr.mxu0 0.0
      %1002 = vmatpush1.msra.mxu0 0.0
      %1003 = vmatprep.subr.mxu0 0.0
      %1004 = vmatpush1.msra.mxu0 0.0
      %1005 = vmatprep.subr.mxu0 0.0
      %1006 = vmatpush1.msra.mxu0 0.0
      %1007 = vmatprep.subr.mxu0 0.0
      %1008 = vmatpush1.msra.mxu0 0.0
      %1009 = vmatprep.subr.mxu0 0.0
      %1010 = vmatpush1.msra.mxu0 0.0
      %1011 = vmatprep.subr.mxu0 0.0
      %1012 = vmatpush1.msra.mxu0 0.0
      %1013 = vmatprep.subr.mxu0 0.0
      %1014 = vmatpush1.msra.mxu0 0.0
      %1015 = vmatprep.subr.mxu0 0.0
      %1016 = vmatpush1.msra.mxu0 0.0
      %1017 = vmatprep.subr.mxu0 0.0
      %1018 = vmatpush1.msra.mxu0 0.0
      %1019 = vmatprep.subr.mxu0 0.0
      %1020 = vmatpush1.msra.mxu0 0.0
      %1021 = vmatprep.subr.mxu0 0.0
      %1022 = vmatpush1.msra.mxu0 0.0
      %1023 = vmatprep.subr.mxu0 0.0
      %1024 = vmatpush1.msra.mxu0 0.0
      %1025 = vmatprep.subr.mxu0 0.0
      %1026 = vmatpush1.msra.mxu0 0.0
      %1027 = vmatprep.subr.mxu0 0.0
      %1028 = vmatpush1.msra.mxu0 0.0
      %1029 = vmatprep.subr.mxu0 0.0
      %1030 = vmatpush1.msra.mxu0 0.0
      %1031 = vmatprep.subr.mxu0 0.0
      %1032 = vmatpush1.msra.mxu0 0.0
      %1033 = vmatprep.subr.mxu0 0.0
      %1034 = vmatpush1.msra.mxu0 0.0
      %1035 = vmatprep.subr.mxu0 0.0
      %1036 = vmatpush1.msra.mxu0 0.0
      %1037 = vmatprep.subr.mxu0 0.0
      %1038 = vmatpush1.msra.mxu0 0.0
      %1039 = vmatprep.subr.mxu0 0.0
      %1040 = vmatpush1.msra.mxu0 0.0
      %1041 = vmatprep.subr.mxu0 0.0
      %1042 = vmatpush1.msra.mxu0 0.0
      %1043 = vmatprep.subr.mxu0 0.0
      %1044 = vmatpush1.msra.mxu0 0.0
      %1045 = vmatprep.subr.mxu0 0.0
      %1046 = vmatpush1.msra.mxu0 0.0
      %1047 = vmatprep.subr.mxu0 0.0
      %1048 = vmatpush1.msra.mxu0 0.0
      %1049 = vmatprep.subr.mxu0 0.0
      %1050 = vmatpush1.msra.mxu0 0.0
      %1051 = vmatprep.subr.mxu0 0.0
      %1052 = vmatpush1.msra.mxu0 0.0
      %1053 = vmatprep.mubr.f32.mxu0 0.0
      %1054 = vmatmul.mubr.f32.gmra.mrb[0].mxu0 %v984
      %v1055 = vpop.f32.mrb[0].mxu0
      %v1056 = vadd.f32 0.0, %v1055
      %v1057 = vpop.f32.mrb[0].mxu0
      %1058 = vmatprep.mubr.f32.mxu0 0.0
      %1059 = vmatmul.mubr.f32.gmra.mrb[0].mxu0 %v987
      %v1060 = vpop.f32.mrb[0].mxu0
      %v1061 = vadd.f32 0.0, %v1060
      %v1062 = vpop.f32.mrb[0].mxu0
      %1063 = vdwg.mxu0
      %v1064 = vmul.f32 %v1056, %v981
      %v1065 = vmul.f32 %v1061, %v982
      %1068 = vrot.lane.b32.xlu0 %v766, 96
      %v1069 = vpop.permute.xlu0 %1068
      %1070 = vrot.lane.b32.xlu0 %v771, 96
      %v1071 = vpop.permute.xlu0 %1070
      %v1074 = vadd.f32 %v1064, %v1069
      %v1075 = vadd.f32 %v1065, %v1071
      %vm1076 = vcmp.ge.f32.partialorder %v1074, 0.0
      %vm1077 = vcmp.ge.f32.partialorder %v1075, 0.0
      %v1078 = vmul.f32 %v1074, 0.2
      %v1079 = vmul.f32 %v1075, 0.2
      %v1080 = vsel %vm1076, %v1074, %v1078
      %v1081 = vsel %vm1077, %v1075, %v1079
      %1084 = vrot.lane.b32.xlu0 %v897, 127
      %v1085 = vpop.permute.xlu0 %1084
      %1086 = vrot.lane.b32.xlu0 %v902, 127
      %v1087 = vpop.permute.xlu0 %1086
      %1090 = vxpose.xlu0.b32.start [1/16] %v1085, 128
      %1091 = vxpose.xlu0.b32.cont [2/16] %v1087, 128
      %1092 = vxpose.xlu0.b32.cont [3/16] 0.0, 128
      %1093 = vxpose.xlu0.b32.cont [4/16] 0.0, 128
      %1094 = vxpose.xlu0.b32.cont [5/16] 0.0, 128
      %1095 = vxpose.xlu0.b32.cont [6/16] 0.0, 128
      %1096 = vxpose.xlu0.b32.cont [7/16] 0.0, 128
      %1097 = vxpose.xlu0.b32.cont [8/16] 0.0, 128
      %1098 = vxpose.xlu0.b32.cont [9/16] 0.0, 128
      %1099 = vxpose.xlu0.b32.cont [10/16] 0.0, 128
      %1100 = vxpose.xlu0.b32.cont [11/16] 0.0, 128
      %1101 = vxpose.xlu0.b32.cont [12/16] 0.0, 128
      %1102 = vxpose.xlu0.b32.cont [13/16] 0.0, 128
      %1103 = vxpose.xlu0.b32.cont [14/16] 0.0, 128
      %1104 = vxpose.xlu0.b32.cont [15/16] 0.0, 128
      %1105 = vxpose.xlu0.b32.end [16/16] 0.0, 128
      %v1106 = vpop.trf.xlu0
      %v1107 = vpop.trf.xlu0
      %v1108 = vpop.trf.xlu0
      %v1109 = vpop.trf.xlu0
      %v1110 = vpop.trf.xlu0
      %v1111 = vpop.trf.xlu0
      %v1112 = vpop.trf.xlu0
      %v1113 = vpop.trf.xlu0
      %v1114 = vpop.trf.xlu0
      %v1115 = vpop.trf.xlu0
      %v1116 = vpop.trf.xlu0
      %v1117 = vpop.trf.xlu0
      %v1118 = vpop.trf.xlu0
      %v1119 = vpop.trf.xlu0
      %v1120 = vpop.trf.xlu0
      %v1121 = vpop.trf.xlu0
      %1122 = vset.pattern.permute.xlu0 0
      %1123 = vperm.xlu0 %1122, %v897
      %v1124 = vpop.permute.xlu0 %1123
      %1126 = vset.pattern.permute.xlu0 0
      %1127 = vperm.xlu0 %1126, %v902
      %v1128 = vpop.permute.xlu0 %1127
      %v1130 = vlaneseq
      %v1131 = vshrl.u32 %v1130, 7
      %v1132 = vsub.s32 0, %v1131
      %v1133 = vrot.slane %v1106, %v1132
      %v1134 = vadd.f32 %v1124, %v1133
      %v1135 = vadd.f32 %v1128, %v1133
      %vm1136 = vcmp.ge.f32.partialorder %v1134, 0.0
      %vm1137 = vcmp.ge.f32.partialorder %v1135, 0.0
      %v1138 = vmul.f32 %v1134, 0.2
      %v1139 = vmul.f32 %v1135, 0.2
      %v1140 = vsel %vm1136, %v1134, %v1138
      %v1141 = vsel %vm1137, %v1135, %v1139
      %v1142 = vsub.f32 0.0, %v1140
      %v1143 = vsub.f32 0.0, %v1141
      %v1144 = vmul.f32 %v1142, 1.442695
      %v1145 = vpow.pop %v1144
      %v1146 = vmul.f32 %v1143, 1.442695
      %v1147 = vpow.pop %v1146
      %v1148 = vsel %vm671, %v1145, 0.0
      %v1149 = vsel %vm672, %v1147, 0.0
      %v1150 = vsel %vm686, %v1148, 0.0
      %1151 = vadd.xlane.f32.xlu0 %v1150
      %v1152 = vpop.xlane.xlu0 %1151
      %v1153 = vsel %vm686, %v1149, 0.0
      %1154 = vadd.xlane.f32.xlu0 %v1153
      %v1155 = vpop.xlane.xlu0 %1154
      %v1156 = vadd.f32 %v1152, 9e-15
      %v1157 = vadd.f32 %v1155, 9e-15
      %v1158 = vrcp.pop %v1156
      %v1159 = vrcp.pop %v1157
      %v1161 = vsel %vm686, %v1148, 0
      %v1164 = vsel %vm686, %v1149, 0
      %1166 = vmatprep.subr.mxu0 0.0
      %1167 = vmatpush1.msra.mxu0 %v794
      %1168 = vmatprep.subr.mxu0 0.0
      %1169 = vmatpush1.msra.mxu0 %v795
      %1170 = vmatprep.subr.mxu0 0.0
      %1171 = vmatpush1.msra.mxu0 0.0
      %1172 = vmatprep.subr.mxu0 0.0
      %1173 = vmatpush1.msra.mxu0 0.0
      %1174 = vmatprep.subr.mxu0 0.0
      %1175 = vmatpush1.msra.mxu0 0.0
      %1176 = vmatprep.subr.mxu0 0.0
      %1177 = vmatpush1.msra.mxu0 0.0
      %1178 = vmatprep.subr.mxu0 0.0
      %1179 = vmatpush1.msra.mxu0 0.0
      %1180 = vmatprep.subr.mxu0 0.0
      %1181 = vmatpush1.msra.mxu0 0.0
      %1182 = vmatprep.subr.mxu0 0.0
      %1183 = vmatpush1.msra.mxu0 0.0
      %1184 = vmatprep.subr.mxu0 0.0
      %1185 = vmatpush1.msra.mxu0 0.0
      %1186 = vmatprep.subr.mxu0 0.0
      %1187 = vmatpush1.msra.mxu0 0.0
      %1188 = vmatprep.subr.mxu0 0.0
      %1189 = vmatpush1.msra.mxu0 0.0
      %1190 = vmatprep.subr.mxu0 0.0
      %1191 = vmatpush1.msra.mxu0 0.0
      %1192 = vmatprep.subr.mxu0 0.0
      %1193 = vmatpush1.msra.mxu0 0.0
      %1194 = vmatprep.subr.mxu0 0.0
      %1195 = vmatpush1.msra.mxu0 0.0
      %1196 = vmatprep.subr.mxu0 0.0
      %1197 = vmatpush1.msra.mxu0 0.0
      %1198 = vmatprep.subr.mxu0 0.0
      %1199 = vmatpush1.msra.mxu0 0.0
      %1200 = vmatprep.subr.mxu0 0.0
      %1201 = vmatpush1.msra.mxu0 0.0
      %1202 = vmatprep.subr.mxu0 0.0
      %1203 = vmatpush1.msra.mxu0 0.0
      %1204 = vmatprep.subr.mxu0 0.0
      %1205 = vmatpush1.msra.mxu0 0.0
      %1206 = vmatprep.subr.mxu0 0.0
      %1207 = vmatpush1.msra.mxu0 0.0
      %1208 = vmatprep.subr.mxu0 0.0
      %1209 = vmatpush1.msra.mxu0 0.0
      %1210 = vmatprep.subr.mxu0 0.0
      %1211 = vmatpush1.msra.mxu0 0.0
      %1212 = vmatprep.subr.mxu0 0.0
      %1213 = vmatpush1.msra.mxu0 0.0
      %1214 = vmatprep.subr.mxu0 0.0
      %1215 = vmatpush1.msra.mxu0 0.0
      %1216 = vmatprep.subr.mxu0 0.0
      %1217 = vmatpush1.msra.mxu0 0.0
      %1218 = vmatprep.subr.mxu0 0.0
      %1219 = vmatpush1.msra.mxu0 0.0
      %1220 = vmatprep.subr.mxu0 0.0
      %1221 = vmatpush1.msra.mxu0 0.0
      %1222 = vmatprep.subr.mxu0 0.0
      %1223 = vmatpush1.msra.mxu0 0.0
      %1224 = vmatprep.subr.mxu0 0.0
      %1225 = vmatpush1.msra.mxu0 0.0
      %1226 = vmatprep.subr.mxu0 0.0
      %1227 = vmatpush1.msra.mxu0 0.0
      %1228 = vmatprep.subr.mxu0 0.0
      %1229 = vmatpush1.msra.mxu0 0.0
      %1230 = vmatprep.mubr.f32.mxu0 0.0
      %1231 = vmatmul.mubr.f32.gmra.mrb[0].mxu0 %v1161
      %v1232 = vpop.f32.mrb[0].mxu0
      %v1233 = vadd.f32 0.0, %v1232
      %v1234 = vpop.f32.mrb[0].mxu0
      %1235 = vmatprep.mubr.f32.mxu0 0.0
      %1236 = vmatmul.mubr.f32.gmra.mrb[0].mxu0 %v1164
      %v1237 = vpop.f32.mrb[0].mxu0
      %v1238 = vadd.f32 0.0, %v1237
      %v1239 = vpop.f32.mrb[0].mxu0
      %1240 = vdwg.mxu0
      %v1241 = vmul.f32 %v1233, %v1158
      %v1242 = vmul.f32 %v1238, %v1159
      %1245 = vrot.lane.b32.xlu0 %v776, 96
      %v1246 = vpop.permute.xlu0 %1245
      %1247 = vrot.lane.b32.xlu0 %v781, 96
      %v1248 = vpop.permute.xlu0 %1247
      %v1251 = vadd.f32 %v1241, %v1246
      %v1252 = vadd.f32 %v1242, %v1248
      %vm1253 = vcmp.ge.f32.partialorder %v1251, 0.0
      %vm1254 = vcmp.ge.f32.partialorder %v1252, 0.0
      %v1255 = vmul.f32 %v1251, 0.2
      %v1256 = vmul.f32 %v1252, 0.2
      %v1257 = vsel %vm1253, %v1251, %v1255
      %v1258 = vsel %vm1254, %v1252, %v1256
      %v1259 = vld [vmem:[%s637] sm:$0xff]
      %v1260 = vld [vmem:[%s637 + $0x8] sm:$0xff]
      %v1261 = vld [vmem:[%s637 + $0x10] sm:$0xff]
      %v1262 = vld [vmem:[%s637 + $0x18] sm:$0xff]
      %v1263 = vld [vmem:[%s640] sm:$0x1]
      %v1265 = vlaneseq
      %v1266 = vshrl.u32 %v1265, 7
      %v1267 = vsub.s32 0, %v1266
      %v1268 = vrot.slane %v1263, %v1267
      %v1271 = vsel %vm807, %v1080, 0
      %v1274 = vsel %vm807, %v1081, 0
      %v1277 = vsel %vm807, %v1257, 0
      %v1280 = vsel %vm807, %v1258, 0
      %1282 = vmatprep.subr.mxu0 0.0
      %1283 = vmatpush1.msra.mxu0 %v1259
      %1284 = vmatprep.subr.mxu0 0.0
      %1285 = vmatpush1.msra.mxu0 %v1260
      %1286 = vmatprep.subr.mxu0 0.0
      %1287 = vmatpush1.msra.mxu0 %v1261
      %1288 = vmatprep.subr.mxu0 0.0
      %1289 = vmatpush1.msra.mxu0 %v1262
      %1290 = vmatprep.subr.mxu0 0.0
      %1291 = vmatpush1.msra.mxu0 0.0
      %1292 = vmatprep.subr.mxu0 0.0
      %1293 = vmatpush1.msra.mxu0 0.0
      %1294 = vmatprep.subr.mxu0 0.0
      %1295 = vmatpush1.msra.mxu0 0.0
      %1296 = vmatprep.subr.mxu0 0.0
      %1297 = vmatpush1.msra.mxu0 0.0
      %1298 = vmatprep.subr.mxu0 0.0
      %1299 = vmatpush1.msra.mxu0 0.0
      %1300 = vmatprep.subr.mxu0 0.0
      %1301 = vmatpush1.msra.mxu0 0.0
      %1302 = vmatprep.subr.mxu0 0.0
      %1303 = vmatpush1.msra.mxu0 0.0
      %1304 = vmatprep.subr.mxu0 0.0
      %1305 = vmatpush1.msra.mxu0 0.0
      %1306 = vmatprep.subr.mxu0 0.0
      %1307 = vmatpush1.msra.mxu0 0.0
      %1308 = vmatprep.subr.mxu0 0.0
      %1309 = vmatpush1.msra.mxu0 0.0
      %1310 = vmatprep.subr.mxu0 0.0
      %1311 = vmatpush1.msra.mxu0 0.0
      %1312 = vmatprep.subr.mxu0 0.0
      %1313 = vmatpush1.msra.mxu0 0.0
      %1314 = vmatprep.subr.mxu0 0.0
      %1315 = vmatpush1.msra.mxu0 0.0
      %1316 = vmatprep.subr.mxu0 0.0
      %1317 = vmatpush1.msra.mxu0 0.0
      %1318 = vmatprep.subr.mxu0 0.0
      %1319 = vmatpush1.msra.mxu0 0.0
      %1320 = vmatprep.subr.mxu0 0.0
      %1321 = vmatpush1.msra.mxu0 0.0
      %1322 = vmatprep.subr.mxu0 0.0
      %1323 = vmatpush1.msra.mxu0 0.0
      %1324 = vmatprep.subr.mxu0 0.0
      %1325 = vmatpush1.msra.mxu0 0.0
      %1326 = vmatprep.subr.mxu0 0.0
      %1327 = vmatpush1.msra.mxu0 0.0
      %1328 = vmatprep.subr.mxu0 0.0
      %1329 = vmatpush1.msra.mxu0 0.0
      %1330 = vmatprep.subr.mxu0 0.0
      %1331 = vmatpush1.msra.mxu0 0.0
      %1332 = vmatprep.subr.mxu0 0.0
      %1333 = vmatpush1.msra.mxu0 0.0
      %1334 = vmatprep.subr.mxu0 0.0
      %1335 = vmatpush1.msra.mxu0 0.0
      %1336 = vmatprep.subr.mxu0 0.0
      %1337 = vmatpush1.msra.mxu0 0.0
      %1338 = vmatprep.subr.mxu0 0.0
      %1339 = vmatpush1.msra.mxu0 0.0
      %1340 = vmatprep.subr.mxu0 0.0
      %1341 = vmatpush1.msra.mxu0 0.0
      %1342 = vmatprep.subr.mxu0 0.0
      %1343 = vmatpush1.msra.mxu0 0.0
      %1344 = vmatprep.subr.mxu0 0.0
      %1345 = vmatpush1.msra.mxu0 0.0
      %1346 = vmatprep.mubr.f32.mxu0 0.0
      %1347 = vmatmul.mubr.f32.gmra.mrb[0].mxu0 %v1271
      %v1348 = vpop.f32.mrb[0].mxu0
      %v1349 = vadd.f32 %v1268, %v1348
      %v1350 = vpop.f32.mrb[0].mxu0
      %1351 = vmatprep.mubr.f32.mxu0 0.0
      %1352 = vmatmul.mubr.f32.gmra.mrb[0].mxu0 %v1274
      %v1353 = vpop.f32.mrb[0].mxu0
      %v1354 = vadd.f32 %v1268, %v1353
      %v1355 = vpop.f32.mrb[0].mxu0
      %1356 = vmatprep.mubr.f32.mxu0 0.0
      %1357 = vmatmul.mubr.f32.gmra.mrb[0].mxu0 %v1277
      %v1358 = vpop.f32.mrb[0].mxu0
      %v1359 = vadd.f32 %v1268, %v1358
      %v1360 = vpop.f32.mrb[0].mxu0
      %1361 = vmatprep.mubr.f32.mxu0 0.0
      %1362 = vmatmul.mubr.f32.gmra.mrb[0].mxu0 %v1280
      %v1363 = vpop.f32.mrb[0].mxu0
      %v1364 = vadd.f32 %v1268, %v1363
      %v1365 = vpop.f32.mrb[0].mxu0
      %1366 = vdwg.mxu0
      %vm1367 = vcmp.ge.f32.partialorder %v1349, 0.0
      %vm1368 = vcmp.ge.f32.partialorder %v1354, 0.0
      %vm1369 = vcmp.ge.f32.partialorder %v1359, 0.0
      %vm1370 = vcmp.ge.f32.partialorder %v1364, 0.0
      %v1371 = vmul.f32 %v1349, 0.2
      %v1372 = vmul.f32 %v1354, 0.2
      %v1373 = vmul.f32 %v1359, 0.2
      %v1374 = vmul.f32 %v1364, 0.2
      %v1375 = vsel %vm1367, %v1349, %v1371
      %v1376 = vsel %vm1368, %v1354, %v1372
      %v1377 = vsel %vm1369, %v1359, %v1373
      %v1378 = vsel %vm1370, %v1364, %v1374
      %v1379 = vld [vmem:[%s645] sm:$0xff]
      %v1380 = vld [vmem:[%s645 + $0x8] sm:$0xff]
      %v1381 = vld [vmem:[%s645 + $0x10] sm:$0xff]
      %v1382 = vld [vmem:[%s645 + $0x18] sm:$0xff]
      %v1383 = vld [vmem:[%s648] sm:$0x1]
      %v1385 = vlaneseq
      %v1386 = vshrl.u32 %v1385, 7
      %v1387 = vsub.s32 0, %v1386
      %v1388 = vrot.slane %v1383, %v1387
      %v1391 = vsel %vm807, %v1375, 0
      %v1394 = vsel %vm807, %v1376, 0
      %v1397 = vsel %vm807, %v1377, 0
      %v1400 = vsel %vm807, %v1378, 0
      %1402 = vmatprep.subr.mxu0 0.0
      %1403 = vmatpush1.msra.mxu0 %v1379
      %1404 = vmatprep.subr.mxu0 0.0
      %1405 = vmatpush1.msra.mxu0 %v1380
      %1406 = vmatprep.subr.mxu0 0.0
      %1407 = vmatpush1.msra.mxu0 %v1381
      %1408 = vmatprep.subr.mxu0 0.0
      %1409 = vmatpush1.msra.mxu0 %v1382
      %1410 = vmatprep.subr.mxu0 0.0
      %1411 = vmatpush1.msra.mxu0 0.0
      %1412 = vmatprep.subr.mxu0 0.0
      %1413 = vmatpush1.msra.mxu0 0.0
      %1414 = vmatprep.subr.mxu0 0.0
      %1415 = vmatpush1.msra.mxu0 0.0
      %1416 = vmatprep.subr.mxu0 0.0
      %1417 = vmatpush1.msra.mxu0 0.0
      %1418 = vmatprep.subr.mxu0 0.0
      %1419 = vmatpush1.msra.mxu0 0.0
      %1420 = vmatprep.subr.mxu0 0.0
      %1421 = vmatpush1.msra.mxu0 0.0
      %1422 = vmatprep.subr.mxu0 0.0
      %1423 = vmatpush1.msra.mxu0 0.0
      %1424 = vmatprep.subr.mxu0 0.0
      %1425 = vmatpush1.msra.mxu0 0.0
      %1426 = vmatprep.subr.mxu0 0.0
      %1427 = vmatpush1.msra.mxu0 0.0
      %1428 = vmatprep.subr.mxu0 0.0
      %1429 = vmatpush1.msra.mxu0 0.0
      %1430 = vmatprep.subr.mxu0 0.0
      %1431 = vmatpush1.msra.mxu0 0.0
      %1432 = vmatprep.subr.mxu0 0.0
      %1433 = vmatpush1.msra.mxu0 0.0
      %1434 = vmatprep.subr.mxu0 0.0
      %1435 = vmatpush1.msra.mxu0 0.0
      %1436 = vmatprep.subr.mxu0 0.0
      %1437 = vmatpush1.msra.mxu0 0.0
      %1438 = vmatprep.subr.mxu0 0.0
      %1439 = vmatpush1.msra.mxu0 0.0
      %1440 = vmatprep.subr.mxu0 0.0
      %1441 = vmatpush1.msra.mxu0 0.0
      %1442 = vmatprep.subr.mxu0 0.0
      %1443 = vmatpush1.msra.mxu0 0.0
      %1444 = vmatprep.subr.mxu0 0.0
      %1445 = vmatpush1.msra.mxu0 0.0
      %1446 = vmatprep.subr.mxu0 0.0
      %1447 = vmatpush1.msra.mxu0 0.0
      %1448 = vmatprep.subr.mxu0 0.0
      %1449 = vmatpush1.msra.mxu0 0.0
      %1450 = vmatprep.subr.mxu0 0.0
      %1451 = vmatpush1.msra.mxu0 0.0
      %1452 = vmatprep.subr.mxu0 0.0
      %1453 = vmatpush1.msra.mxu0 0.0
      %1454 = vmatprep.subr.mxu0 0.0
      %1455 = vmatpush1.msra.mxu0 0.0
      %1456 = vmatprep.subr.mxu0 0.0
      %1457 = vmatpush1.msra.mxu0 0.0
      %1458 = vmatprep.subr.mxu0 0.0
      %1459 = vmatpush1.msra.mxu0 0.0
      %1460 = vmatprep.subr.mxu0 0.0
      %1461 = vmatpush1.msra.mxu0 0.0
      %1462 = vmatprep.subr.mxu0 0.0
      %1463 = vmatpush1.msra.mxu0 0.0
      %1464 = vmatprep.subr.mxu0 0.0
      %1465 = vmatpush1.msra.mxu0 0.0
      %1466 = vmatprep.mubr.f32.mxu0 0.0
      %1467 = vmatmul.mubr.f32.gmra.mrb[0].mxu0 %v1391
      %v1468 = vpop.f32.mrb[0].mxu0
      %v1469 = vadd.f32 %v1388, %v1468
      %v1470 = vpop.f32.mrb[0].mxu0
      %1471 = vmatprep.mubr.f32.mxu0 0.0
      %1472 = vmatmul.mubr.f32.gmra.mrb[0].mxu0 %v1394
      %v1473 = vpop.f32.mrb[0].mxu0
      %v1474 = vadd.f32 %v1388, %v1473
      %v1475 = vpop.f32.mrb[0].mxu0
      %1476 = vmatprep.mubr.f32.mxu0 0.0
      %1477 = vmatmul.mubr.f32.gmra.mrb[0].mxu0 %v1397
      %v1478 = vpop.f32.mrb[0].mxu0
      %v1479 = vadd.f32 %v1388, %v1478
      %v1480 = vpop.f32.mrb[0].mxu0
      %1481 = vmatprep.mubr.f32.mxu0 0.0
      %1482 = vmatmul.mubr.f32.gmra.mrb[0].mxu0 %v1400
      %v1483 = vpop.f32.mrb[0].mxu0
      %v1484 = vadd.f32 %v1388, %v1483
      %v1485 = vpop.f32.mrb[0].mxu0
      %1486 = vdwg.mxu0
      %1489 = vrot.lane.b32.xlu0 %v1469, 127
      %v1490 = vpop.permute.xlu0 %1489
      %1491 = vrot.lane.b32.xlu0 %v1474, 127
      %v1492 = vpop.permute.xlu0 %1491
      %1495 = vxpose.xlu0.b32.start [1/16] %v1490, 128
      %1496 = vxpose.xlu0.b32.cont [2/16] %v1492, 128
      %1497 = vxpose.xlu0.b32.cont [3/16] 0.0, 128
      %1498 = vxpose.xlu0.b32.cont [4/16] 0.0, 128
      %1499 = vxpose.xlu0.b32.cont [5/16] 0.0, 128
      %1500 = vxpose.xlu0.b32.cont [6/16] 0.0, 128
      %1501 = vxpose.xlu0.b32.cont [7/16] 0.0, 128
      %1502 = vxpose.xlu0.b32.cont [8/16] 0.0, 128
      %1503 = vxpose.xlu0.b32.cont [9/16] 0.0, 128
      %1504 = vxpose.xlu0.b32.cont [10/16] 0.0, 128
      %1505 = vxpose.xlu0.b32.cont [11/16] 0.0, 128
      %1506 = vxpose.xlu0.b32.cont [12/16] 0.0, 128
      %1507 = vxpose.xlu0.b32.cont [13/16] 0.0, 128
      %1508 = vxpose.xlu0.b32.cont [14/16] 0.0, 128
      %1509 = vxpose.xlu0.b32.cont [15/16] 0.0, 128
      %1510 = vxpose.xlu0.b32.end [16/16] 0.0, 128
      %v1511 = vpop.trf.xlu0
      %v1512 = vpop.trf.xlu0
      %v1513 = vpop.trf.xlu0
      %v1514 = vpop.trf.xlu0
      %v1515 = vpop.trf.xlu0
      %v1516 = vpop.trf.xlu0
      %v1517 = vpop.trf.xlu0
      %v1518 = vpop.trf.xlu0
      %v1519 = vpop.trf.xlu0
      %v1520 = vpop.trf.xlu0
      %v1521 = vpop.trf.xlu0
      %v1522 = vpop.trf.xlu0
      %v1523 = vpop.trf.xlu0
      %v1524 = vpop.trf.xlu0
      %v1525 = vpop.trf.xlu0
      %v1526 = vpop.trf.xlu0
      %1527 = vset.pattern.permute.xlu0 0
      %1528 = vperm.xlu0 %1527, %v1469
      %v1529 = vpop.permute.xlu0 %1528
      %1531 = vset.pattern.permute.xlu0 0
      %1532 = vperm.xlu0 %1531, %v1474
      %v1533 = vpop.permute.xlu0 %1532
      %v1535 = vlaneseq
      %v1536 = vshrl.u32 %v1535, 7
      %v1537 = vsub.s32 0, %v1536
      %v1538 = vrot.slane %v1511, %v1537
      %v1539 = vadd.f32 %v1529, %v1538
      %v1540 = vadd.f32 %v1533, %v1538
      %vm1541 = vcmp.ge.f32.partialorder %v1539, 0.0
      %vm1542 = vcmp.ge.f32.partialorder %v1540, 0.0
      %v1543 = vmul.f32 %v1539, 0.2
      %v1544 = vmul.f32 %v1540, 0.2
      %v1545 = vsel %vm1541, %v1539, %v1543
      %v1546 = vsel %vm1542, %v1540, %v1544
      %v1547 = vsub.f32 0.0, %v1545
      %v1548 = vsub.f32 0.0, %v1546
      %v1549 = vmul.f32 %v1547, 1.442695
      %v1550 = vpow.pop %v1549
      %v1551 = vmul.f32 %v1548, 1.442695
      %v1552 = vpow.pop %v1551
      %v1553 = vsel %vm671, %v1550, 0.0
      %v1554 = vsel %vm672, %v1552, 0.0
      %v1555 = vsel %vm686, %v1553, 0.0
      %1556 = vadd.xlane.f32.xlu0 %v1555
      %v1557 = vpop.xlane.xlu0 %1556
      %v1558 = vsel %vm686, %v1554, 0.0
      %1559 = vadd.xlane.f32.xlu0 %v1558
      %v1560 = vpop.xlane.xlu0 %1559
      %v1561 = vadd.f32 %v1557, 9e-15
      %v1562 = vadd.f32 %v1560, 9e-15
      %v1563 = vrcp.pop %v1561
      %v1564 = vrcp.pop %v1562
      %v1566 = vsel %vm686, %v1553, 0
      %v1569 = vsel %vm686, %v1554, 0
      %1571 = vmatprep.subr.mxu0 0.0
      %1572 = vmatpush1.msra.mxu0 %v1375
      %1573 = vmatprep.subr.mxu0 0.0
      %1574 = vmatpush1.msra.mxu0 %v1376
      %1575 = vmatprep.subr.mxu0 0.0
      %1576 = vmatpush1.msra.mxu0 0.0
      %1577 = vmatprep.subr.mxu0 0.0
      %1578 = vmatpush1.msra.mxu0 0.0
      %1579 = vmatprep.subr.mxu0 0.0
      %1580 = vmatpush1.msra.mxu0 0.0
      %1581 = vmatprep.subr.mxu0 0.0
      %1582 = vmatpush1.msra.mxu0 0.0
      %1583 = vmatprep.subr.mxu0 0.0
      %1584 = vmatpush1.msra.mxu0 0.0
      %1585 = vmatprep.subr.mxu0 0.0
      %1586 = vmatpush1.msra.mxu0 0.0
      %1587 = vmatprep.subr.mxu0 0.0
      %1588 = vmatpush1.msra.mxu0 0.0
      %1589 = vmatprep.subr.mxu0 0.0
      %1590 = vmatpush1.msra.mxu0 0.0
      %1591 = vmatprep.subr.mxu0 0.0
      %1592 = vmatpush1.msra.mxu0 0.0
      %1593 = vmatprep.subr.mxu0 0.0
      %1594 = vmatpush1.msra.mxu0 0.0
      %1595 = vmatprep.subr.mxu0 0.0
      %1596 = vmatpush1.msra.mxu0 0.0
      %1597 = vmatprep.subr.mxu0 0.0
      %1598 = vmatpush1.msra.mxu0 0.0
      %1599 = vmatprep.subr.mxu0 0.0
      %1600 = vmatpush1.msra.mxu0 0.0
      %1601 = vmatprep.subr.mxu0 0.0
      %1602 = vmatpush1.msra.mxu0 0.0
      %1603 = vmatprep.subr.mxu0 0.0
      %1604 = vmatpush1.msra.mxu0 0.0
      %1605 = vmatprep.subr.mxu0 0.0
      %1606 = vmatpush1.msra.mxu0 0.0
      %1607 = vmatprep.subr.mxu0 0.0
      %1608 = vmatpush1.msra.mxu0 0.0
      %1609 = vmatprep.subr.mxu0 0.0
      %1610 = vmatpush1.msra.mxu0 0.0
      %1611 = vmatprep.subr.mxu0 0.0
      %1612 = vmatpush1.msra.mxu0 0.0
      %1613 = vmatprep.subr.mxu0 0.0
      %1614 = vmatpush1.msra.mxu0 0.0
      %1615 = vmatprep.subr.mxu0 0.0
      %1616 = vmatpush1.msra.mxu0 0.0
      %1617 = vmatprep.subr.mxu0 0.0
      %1618 = vmatpush1.msra.mxu0 0.0
      %1619 = vmatprep.subr.mxu0 0.0
      %1620 = vmatpush1.msra.mxu0 0.0
      %1621 = vmatprep.subr.mxu0 0.0
      %1622 = vmatpush1.msra.mxu0 0.0
      %1623 = vmatprep.subr.mxu0 0.0
      %1624 = vmatpush1.msra.mxu0 0.0
      %1625 = vmatprep.subr.mxu0 0.0
      %1626 = vmatpush1.msra.mxu0 0.0
      %1627 = vmatprep.subr.mxu0 0.0
      %1628 = vmatpush1.msra.mxu0 0.0
      %1629 = vmatprep.subr.mxu0 0.0
      %1630 = vmatpush1.msra.mxu0 0.0
      %1631 = vmatprep.subr.mxu0 0.0
      %1632 = vmatpush1.msra.mxu0 0.0
      %1633 = vmatprep.subr.mxu0 0.0
      %1634 = vmatpush1.msra.mxu0 0.0
      %1635 = vmatprep.mubr.f32.mxu0 0.0
      %1636 = vmatmul.mubr.f32.gmra.mrb[0].mxu0 %v1566
      %v1637 = vpop.f32.mrb[0].mxu0
      %v1638 = vadd.f32 0.0, %v1637
      %v1639 = vpop.f32.mrb[0].mxu0
      %1640 = vmatprep.mubr.f32.mxu0 0.0
      %1641 = vmatmul.mubr.f32.gmra.mrb[0].mxu0 %v1569
      %v1642 = vpop.f32.mrb[0].mxu0
      %v1643 = vadd.f32 0.0, %v1642
      %v1644 = vpop.f32.mrb[0].mxu0
      %1645 = vdwg.mxu0
      %v1646 = vmul.f32 %v1638, %v1563
      %v1647 = vmul.f32 %v1643, %v1564
      %1650 = vrot.lane.b32.xlu0 %v1349, 96
      %v1651 = vpop.permute.xlu0 %1650
      %1652 = vrot.lane.b32.xlu0 %v1354, 96
      %v1653 = vpop.permute.xlu0 %1652
      %v1656 = vadd.f32 %v1646, %v1651
      %v1657 = vadd.f32 %v1647, %v1653
      %vm1658 = vcmp.ge.f32.partialorder %v1656, 0.0
      %vm1659 = vcmp.ge.f32.partialorder %v1657, 0.0
      %v1660 = vmul.f32 %v1656, 0.2
      %v1661 = vmul.f32 %v1657, 0.2
      %v1662 = vsel %vm1658, %v1656, %v1660
      %v1663 = vsel %vm1659, %v1657, %v1661
      %1666 = vrot.lane.b32.xlu0 %v1479, 127
      %v1667 = vpop.permute.xlu0 %1666
      %1668 = vrot.lane.b32.xlu0 %v1484, 127
      %v1669 = vpop.permute.xlu0 %1668
      %1672 = vxpose.xlu0.b32.start [1/16] %v1667, 128
      %1673 = vxpose.xlu0.b32.cont [2/16] %v1669, 128
      %1674 = vxpose.xlu0.b32.cont [3/16] 0.0, 128
      %1675 = vxpose.xlu0.b32.cont [4/16] 0.0, 128
      %1676 = vxpose.xlu0.b32.cont [5/16] 0.0, 128
      %1677 = vxpose.xlu0.b32.cont [6/16] 0.0, 128
      %1678 = vxpose.xlu0.b32.cont [7/16] 0.0, 128
      %1679 = vxpose.xlu0.b32.cont [8/16] 0.0, 128
      %1680 = vxpose.xlu0.b32.cont [9/16] 0.0, 128
      %1681 = vxpose.xlu0.b32.cont [10/16] 0.0, 128
      %1682 = vxpose.xlu0.b32.cont [11/16] 0.0, 128
      %1683 = vxpose.xlu0.b32.cont [12/16] 0.0, 128
      %1684 = vxpose.xlu0.b32.cont [13/16] 0.0, 128
      %1685 = vxpose.xlu0.b32.cont [14/16] 0.0, 128
      %1686 = vxpose.xlu0.b32.cont [15/16] 0.0, 128
      %1687 = vxpose.xlu0.b32.end [16/16] 0.0, 128
      %v1688 = vpop.trf.xlu0
      %v1689 = vpop.trf.xlu0
      %v1690 = vpop.trf.xlu0
      %v1691 = vpop.trf.xlu0
      %v1692 = vpop.trf.xlu0
      %v1693 = vpop.trf.xlu0
      %v1694 = vpop.trf.xlu0
      %v1695 = vpop.trf.xlu0
      %v1696 = vpop.trf.xlu0
      %v1697 = vpop.trf.xlu0
      %v1698 = vpop.trf.xlu0
      %v1699 = vpop.trf.xlu0
      %v1700 = vpop.trf.xlu0
      %v1701 = vpop.trf.xlu0
      %v1702 = vpop.trf.xlu0
      %v1703 = vpop.trf.xlu0
      %1704 = vset.pattern.permute.xlu0 0
      %1705 = vperm.xlu0 %1704, %v1479
      %v1706 = vpop.permute.xlu0 %1705
      %1708 = vset.pattern.permute.xlu0 0
      %1709 = vperm.xlu0 %1708, %v1484
      %v1710 = vpop.permute.xlu0 %1709
      %v1712 = vlaneseq
      %v1713 = vshrl.u32 %v1712, 7
      %v1714 = vsub.s32 0, %v1713
      %v1715 = vrot.slane %v1688, %v1714
      %v1716 = vadd.f32 %v1706, %v1715
      %v1717 = vadd.f32 %v1710, %v1715
      %vm1718 = vcmp.ge.f32.partialorder %v1716, 0.0
      %vm1719 = vcmp.ge.f32.partialorder %v1717, 0.0
      %v1720 = vmul.f32 %v1716, 0.2
      %v1721 = vmul.f32 %v1717, 0.2
      %v1722 = vsel %vm1718, %v1716, %v1720
      %v1723 = vsel %vm1719, %v1717, %v1721
      %v1724 = vsub.f32 0.0, %v1722
      %v1725 = vsub.f32 0.0, %v1723
      %v1726 = vmul.f32 %v1724, 1.442695
      %v1727 = vpow.pop %v1726
      %v1728 = vmul.f32 %v1725, 1.442695
      %v1729 = vpow.pop %v1728
      %v1730 = vsel %vm671, %v1727, 0.0
      %v1731 = vsel %vm672, %v1729, 0.0
      %v1732 = vsel %vm686, %v1730, 0.0
      %1733 = vadd.xlane.f32.xlu0 %v1732
      %v1734 = vpop.xlane.xlu0 %1733
      %v1735 = vsel %vm686, %v1731, 0.0
      %1736 = vadd.xlane.f32.xlu0 %v1735
      %v1737 = vpop.xlane.xlu0 %1736
      %v1738 = vadd.f32 %v1734, 9e-15
      %v1739 = vadd.f32 %v1737, 9e-15
      %v1740 = vrcp.pop %v1738
      %v1741 = vrcp.pop %v1739
      %v1743 = vsel %vm686, %v1730, 0
      %v1746 = vsel %vm686, %v1731, 0
      %1748 = vmatprep.subr.mxu0 0.0
      %1749 = vmatpush1.msra.mxu0 %v1377
      %1750 = vmatprep.subr.mxu0 0.0
      %1751 = vmatpush1.msra.mxu0 %v1378
      %1752 = vmatprep.subr.mxu0 0.0
      %1753 = vmatpush1.msra.mxu0 0.0
      %1754 = vmatprep.subr.mxu0 0.0
      %1755 = vmatpush1.msra.mxu0 0.0
      %1756 = vmatprep.subr.mxu0 0.0
      %1757 = vmatpush1.msra.mxu0 0.0
      %1758 = vmatprep.subr.mxu0 0.0
      %1759 = vmatpush1.msra.mxu0 0.0
      %1760 = vmatprep.subr.mxu0 0.0
      %1761 = vmatpush1.msra.mxu0 0.0
      %1762 = vmatprep.subr.mxu0 0.0
      %1763 = vmatpush1.msra.mxu0 0.0
      %1764 = vmatprep.subr.mxu0 0.0
      %1765 = vmatpush1.msra.mxu0 0.0
      %1766 = vmatprep.subr.mxu0 0.0
      %1767 = vmatpush1.msra.mxu0 0.0
      %1768 = vmatprep.subr.mxu0 0.0
      %1769 = vmatpush1.msra.mxu0 0.0
      %1770 = vmatprep.subr.mxu0 0.0
      %1771 = vmatpush1.msra.mxu0 0.0
      %1772 = vmatprep.subr.mxu0 0.0
      %1773 = vmatpush1.msra.mxu0 0.0
      %1774 = vmatprep.subr.mxu0 0.0
      %1775 = vmatpush1.msra.mxu0 0.0
      %1776 = vmatprep.subr.mxu0 0.0
      %1777 = vmatpush1.msra.mxu0 0.0
      %1778 = vmatprep.subr.mxu0 0.0
      %1779 = vmatpush1.msra.mxu0 0.0
      %1780 = vmatprep.subr.mxu0 0.0
      %1781 = vmatpush1.msra.mxu0 0.0
      %1782 = vmatprep.subr.mxu0 0.0
      %1783 = vmatpush1.msra.mxu0 0.0
      %1784 = vmatprep.subr.mxu0 0.0
      %1785 = vmatpush1.msra.mxu0 0.0
      %1786 = vmatprep.subr.mxu0 0.0
      %1787 = vmatpush1.msra.mxu0 0.0
      %1788 = vmatprep.subr.mxu0 0.0
      %1789 = vmatpush1.msra.mxu0 0.0
      %1790 = vmatprep.subr.mxu0 0.0
      %1791 = vmatpush1.msra.mxu0 0.0
      %1792 = vmatprep.subr.mxu0 0.0
      %1793 = vmatpush1.msra.mxu0 0.0
      %1794 = vmatprep.subr.mxu0 0.0
      %1795 = vmatpush1.msra.mxu0 0.0
      %1796 = vmatprep.subr.mxu0 0.0
      %1797 = vmatpush1.msra.mxu0 0.0
      %1798 = vmatprep.subr.mxu0 0.0
      %1799 = vmatpush1.msra.mxu0 0.0
      %1800 = vmatprep.subr.mxu0 0.0
      %1801 = vmatpush1.msra.mxu0 0.0
      %1802 = vmatprep.subr.mxu0 0.0
      %1803 = vmatpush1.msra.mxu0 0.0
      %1804 = vmatprep.subr.mxu0 0.0
      %1805 = vmatpush1.msra.mxu0 0.0
      %1806 = vmatprep.subr.mxu0 0.0
      %1807 = vmatpush1.msra.mxu0 0.0
      %1808 = vmatprep.subr.mxu0 0.0
      %1809 = vmatpush1.msra.mxu0 0.0
      %1810 = vmatprep.subr.mxu0 0.0
      %1811 = vmatpush1.msra.mxu0 0.0
      %1812 = vmatprep.mubr.f32.mxu0 0.0
      %1813 = vmatmul.mubr.f32.gmra.mrb[0].mxu0 %v1743
      %v1814 = vpop.f32.mrb[0].mxu0
      %v1815 = vadd.f32 0.0, %v1814
      %v1816 = vpop.f32.mrb[0].mxu0
      %1817 = vmatprep.mubr.f32.mxu0 0.0
      %1818 = vmatmul.mubr.f32.gmra.mrb[0].mxu0 %v1746
      %v1819 = vpop.f32.mrb[0].mxu0
      %v1820 = vadd.f32 0.0, %v1819
      %v1821 = vpop.f32.mrb[0].mxu0
      %1822 = vdwg.mxu0
      %v1823 = vmul.f32 %v1815, %v1740
      %v1824 = vmul.f32 %v1820, %v1741
      %1827 = vrot.lane.b32.xlu0 %v1359, 96
      %v1828 = vpop.permute.xlu0 %1827
      %1829 = vrot.lane.b32.xlu0 %v1364, 96
      %v1830 = vpop.permute.xlu0 %1829
      %v1833 = vadd.f32 %v1823, %v1828
      %v1834 = vadd.f32 %v1824, %v1830
      %vm1835 = vcmp.ge.f32.partialorder %v1833, 0.0
      %vm1836 = vcmp.ge.f32.partialorder %v1834, 0.0
      %v1837 = vmul.f32 %v1833, 0.2
      %v1838 = vmul.f32 %v1834, 0.2
      %v1839 = vsel %vm1835, %v1833, %v1837
      %v1840 = vsel %vm1836, %v1834, %v1838
      %v1841 = vld [vmem:[%s653] sm:$0xff]
      %v1842 = vld [vmem:[%s653 + $0x8] sm:$0xff]
      %v1843 = vld [vmem:[%s653 + $0x10] sm:$0xff]
      %v1844 = vld [vmem:[%s653 + $0x18] sm:$0xff]
      %v1845 = vld [vmem:[%s656] sm:$0x1]
      %v1847 = vlaneseq
      %v1848 = vshrl.u32 %v1847, 7
      %v1849 = vsub.s32 0, %v1848
      %v1850 = vrot.slane %v1845, %v1849
      %v1853 = vsel %vm807, %v1662, 0
      %v1856 = vsel %vm807, %v1663, 0
      %v1859 = vsel %vm807, %v1839, 0
      %v1862 = vsel %vm807, %v1840, 0
      %1864 = vmatprep.subr.mxu0 0.0
      %1865 = vmatpush1.msra.mxu0 %v1841
      %1866 = vmatprep.subr.mxu0 0.0
      %1867 = vmatpush1.msra.mxu0 %v1842
      %1868 = vmatprep.subr.mxu0 0.0
      %1869 = vmatpush1.msra.mxu0 %v1843
      %1870 = vmatprep.subr.mxu0 0.0
      %1871 = vmatpush1.msra.mxu0 %v1844
      %1872 = vmatprep.subr.mxu0 0.0
      %1873 = vmatpush1.msra.mxu0 0.0
      %1874 = vmatprep.subr.mxu0 0.0
      %1875 = vmatpush1.msra.mxu0 0.0
      %1876 = vmatprep.subr.mxu0 0.0
      %1877 = vmatpush1.msra.mxu0 0.0
      %1878 = vmatprep.subr.mxu0 0.0
      %1879 = vmatpush1.msra.mxu0 0.0
      %1880 = vmatprep.subr.mxu0 0.0
      %1881 = vmatpush1.msra.mxu0 0.0
      %1882 = vmatprep.subr.mxu0 0.0
      %1883 = vmatpush1.msra.mxu0 0.0
      %1884 = vmatprep.subr.mxu0 0.0
      %1885 = vmatpush1.msra.mxu0 0.0
      %1886 = vmatprep.subr.mxu0 0.0
      %1887 = vmatpush1.msra.mxu0 0.0
      %1888 = vmatprep.subr.mxu0 0.0
      %1889 = vmatpush1.msra.mxu0 0.0
      %1890 = vmatprep.subr.mxu0 0.0
      %1891 = vmatpush1.msra.mxu0 0.0
      %1892 = vmatprep.subr.mxu0 0.0
      %1893 = vmatpush1.msra.mxu0 0.0
      %1894 = vmatprep.subr.mxu0 0.0
      %1895 = vmatpush1.msra.mxu0 0.0
      %1896 = vmatprep.subr.mxu0 0.0
      %1897 = vmatpush1.msra.mxu0 0.0
      %1898 = vmatprep.subr.mxu0 0.0
      %1899 = vmatpush1.msra.mxu0 0.0
      %1900 = vmatprep.subr.mxu0 0.0
      %1901 = vmatpush1.msra.mxu0 0.0
      %1902 = vmatprep.subr.mxu0 0.0
      %1903 = vmatpush1.msra.mxu0 0.0
      %1904 = vmatprep.subr.mxu0 0.0
      %1905 = vmatpush1.msra.mxu0 0.0
      %1906 = vmatprep.subr.mxu0 0.0
      %1907 = vmatpush1.msra.mxu0 0.0
      %1908 = vmatprep.subr.mxu0 0.0
      %1909 = vmatpush1.msra.mxu0 0.0
      %1910 = vmatprep.subr.mxu0 0.0
      %1911 = vmatpush1.msra.mxu0 0.0
      %1912 = vmatprep.subr.mxu0 0.0
      %1913 = vmatpush1.msra.mxu0 0.0
      %1914 = vmatprep.subr.mxu0 0.0
      %1915 = vmatpush1.msra.mxu0 0.0
      %1916 = vmatprep.subr.mxu0 0.0
      %1917 = vmatpush1.msra.mxu0 0.0
      %1918 = vmatprep.subr.mxu0 0.0
      %1919 = vmatpush1.msra.mxu0 0.0
      %1920 = vmatprep.subr.mxu0 0.0
      %1921 = vmatpush1.msra.mxu0 0.0
      %1922 = vmatprep.subr.mxu0 0.0
      %1923 = vmatpush1.msra.mxu0 0.0
      %1924 = vmatprep.subr.mxu0 0.0
      %1925 = vmatpush1.msra.mxu0 0.0
      %1926 = vmatprep.subr.mxu0 0.0
      %1927 = vmatpush1.msra.mxu0 0.0
      %1928 = vmatprep.mubr.f32.mxu0 0.0
      %1929 = vmatmul.mubr.f32.gmra.mrb[0].mxu0 %v1853
      %v1930 = vpop.f32.mrb[0].mxu0
      %v1931 = vadd.f32 %v1850, %v1930
      %v1932 = vpop.f32.mrb[0].mxu0
      %1933 = vmatprep.mubr.f32.mxu0 0.0
      %1934 = vmatmul.mubr.f32.gmra.mrb[0].mxu0 %v1856
      %v1935 = vpop.f32.mrb[0].mxu0
      %v1936 = vadd.f32 %v1850, %v1935
      %v1937 = vpop.f32.mrb[0].mxu0
      %1938 = vmatprep.mubr.f32.mxu0 0.0
      %1939 = vmatmul.mubr.f32.gmra.mrb[0].mxu0 %v1859
      %v1940 = vpop.f32.mrb[0].mxu0
      %v1941 = vadd.f32 %v1850, %v1940
      %v1942 = vpop.f32.mrb[0].mxu0
      %1943 = vmatprep.mubr.f32.mxu0 0.0
      %1944 = vmatmul.mubr.f32.gmra.mrb[0].mxu0 %v1862
      %v1945 = vpop.f32.mrb[0].mxu0
      %v1946 = vadd.f32 %v1850, %v1945
      %v1947 = vpop.f32.mrb[0].mxu0
      %1948 = vdwg.mxu0
      %vm1949 = vcmp.ge.f32.partialorder %v1931, 0.0
      %vm1950 = vcmp.ge.f32.partialorder %v1936, 0.0
      %vm1951 = vcmp.ge.f32.partialorder %v1941, 0.0
      %vm1952 = vcmp.ge.f32.partialorder %v1946, 0.0
      %v1953 = vmul.f32 %v1931, 0.2
      %v1954 = vmul.f32 %v1936, 0.2
      %v1955 = vmul.f32 %v1941, 0.2
      %v1956 = vmul.f32 %v1946, 0.2
      %v1957 = vsel %vm1949, %v1931, %v1953
      %v1958 = vsel %vm1950, %v1936, %v1954
      %v1959 = vsel %vm1951, %v1941, %v1955
      %v1960 = vsel %vm1952, %v1946, %v1956
      %v1961 = vld [vmem:[%s660] sm:$0xff]
      %v1962 = vld [vmem:[%s663] sm:$0x1]
      %v1964 = vlaneseq
      %v1965 = vshrl.u32 %v1964, 7
      %v1966 = vsub.s32 0, %v1965
      %v1967 = vrot.slane %v1962, %v1966
      %vm1969 = vcmask 64512
      %v1971 = vsel %vm1969, %v1957, 0
      %v1974 = vsel %vm1969, %v1958, 0
      %v1977 = vsel %vm1969, %v1959, 0
      %v1980 = vsel %vm1969, %v1960, 0
      %1982 = vmatprep.subr.mxu0 0.0
      %1983 = vmatpush1.msra.mxu0 %v1961
      %1984 = vmatprep.subr.mxu0 0.0
      %1985 = vmatpush1.msra.mxu0 0.0
      %1986 = vmatprep.subr.mxu0 0.0
      %1987 = vmatpush1.msra.mxu0 0.0
      %1988 = vmatprep.subr.mxu0 0.0
      %1989 = vmatpush1.msra.mxu0 0.0
      %1990 = vmatprep.subr.mxu0 0.0
      %1991 = vmatpush1.msra.mxu0 0.0
      %1992 = vmatprep.subr.mxu0 0.0
      %1993 = vmatpush1.msra.mxu0 0.0
      %1994 = vmatprep.subr.mxu0 0.0
      %1995 = vmatpush1.msra.mxu0 0.0
      %1996 = vmatprep.subr.mxu0 0.0
      %1997 = vmatpush1.msra.mxu0 0.0
      %1998 = vmatprep.subr.mxu0 0.0
      %1999 = vmatpush1.msra.mxu0 0.0
      %2000 = vmatprep.subr.mxu0 0.0
      %2001 = vmatpush1.msra.mxu0 0.0
      %2002 = vmatprep.subr.mxu0 0.0
      %2003 = vmatpush1.msra.mxu0 0.0
      %2004 = vmatprep.subr.mxu0 0.0
      %2005 = vmatpush1.msra.mxu0 0.0
      %2006 = vmatprep.subr.mxu0 0.0
      %2007 = vmatpush1.msra.mxu0 0.0
      %2008 = vmatprep.subr.mxu0 0.0
      %2009 = vmatpush1.msra.mxu0 0.0
      %2010 = vmatprep.subr.mxu0 0.0
      %2011 = vmatpush1.msra.mxu0 0.0
      %2012 = vmatprep.subr.mxu0 0.0
      %2013 = vmatpush1.msra.mxu0 0.0
      %2014 = vmatprep.subr.mxu0 0.0
      %2015 = vmatpush1.msra.mxu0 0.0
      %2016 = vmatprep.subr.mxu0 0.0
      %2017 = vmatpush1.msra.mxu0 0.0
      %2018 = vmatprep.subr.mxu0 0.0
      %2019 = vmatpush1.msra.mxu0 0.0
      %2020 = vmatprep.subr.mxu0 0.0
      %2021 = vmatpush1.msra.mxu0 0.0
      %2022 = vmatprep.subr.mxu0 0.0
      %2023 = vmatpush1.msra.mxu0 0.0
      %2024 = vmatprep.subr.mxu0 0.0
      %2025 = vmatpush1.msra.mxu0 0.0
      %2026 = vmatprep.subr.mxu0 0.0
      %2027 = vmatpush1.msra.mxu0 0.0
      %2028 = vmatprep.subr.mxu0 0.0
      %2029 = vmatpush1.msra.mxu0 0.0
      %2030 = vmatprep.subr.mxu0 0.0
      %2031 = vmatpush1.msra.mxu0 0.0
      %2032 = vmatprep.subr.mxu0 0.0
      %2033 = vmatpush1.msra.mxu0 0.0
      %2034 = vmatprep.subr.mxu0 0.0
      %2035 = vmatpush1.msra.mxu0 0.0
      %2036 = vmatprep.subr.mxu0 0.0
      %2037 = vmatpush1.msra.mxu0 0.0
      %2038 = vmatprep.subr.mxu0 0.0
      %2039 = vmatpush1.msra.mxu0 0.0
      %2040 = vmatprep.subr.mxu0 0.0
      %2041 = vmatpush1.msra.mxu0 0.0
      %2042 = vmatprep.subr.mxu0 0.0
      %2043 = vmatpush1.msra.mxu0 0.0
      %2044 = vmatprep.subr.mxu0 0.0
      %2045 = vmatpush1.msra.mxu0 0.0
      %2046 = vmatprep.mubr.f32.mxu0 0.0
      %2047 = vmatmul.mubr.f32.gmra.mrb[0].mxu0 %v1971
      %v2048 = vpop.f32.mrb[0].mxu0
      %v2049 = vadd.f32 %v1967, %v2048
      %v2050 = vpop.f32.mrb[0].mxu0
      %2051 = vmatprep.mubr.f32.mxu0 0.0
      %2052 = vmatmul.mubr.f32.gmra.mrb[0].mxu0 %v1974
      %v2053 = vpop.f32.mrb[0].mxu0
      %v2054 = vadd.f32 %v1967, %v2053
      %v2055 = vpop.f32.mrb[0].mxu0
      %2056 = vmatprep.mubr.f32.mxu0 0.0
      %2057 = vmatmul.mubr.f32.gmra.mrb[0].mxu0 %v1977
      %v2058 = vpop.f32.mrb[0].mxu0
      %v2059 = vadd.f32 %v1967, %v2058
      %v2060 = vpop.f32.mrb[0].mxu0
      %2061 = vmatprep.mubr.f32.mxu0 0.0
      %2062 = vmatmul.mubr.f32.gmra.mrb[0].mxu0 %v1980
      %v2063 = vpop.f32.mrb[0].mxu0
      %v2064 = vadd.f32 %v1967, %v2063
      %v2065 = vpop.f32.mrb[0].mxu0
      %2066 = vdwg.mxu0
      %2069 = vrot.lane.b32.xlu0 %v2049, 127
      %v2070 = vpop.permute.xlu0 %2069
      %2071 = vrot.lane.b32.xlu0 %v2054, 127
      %v2072 = vpop.permute.xlu0 %2071
      %2075 = vxpose.xlu0.b32.start [1/16] %v2070, 128
      %2076 = vxpose.xlu0.b32.cont [2/16] %v2072, 128
      %2077 = vxpose.xlu0.b32.cont [3/16] 0.0, 128
      %2078 = vxpose.xlu0.b32.cont [4/16] 0.0, 128
      %2079 = vxpose.xlu0.b32.cont [5/16] 0.0, 128
      %2080 = vxpose.xlu0.b32.cont [6/16] 0.0, 128
      %2081 = vxpose.xlu0.b32.cont [7/16] 0.0, 128
      %2082 = vxpose.xlu0.b32.cont [8/16] 0.0, 128
      %2083 = vxpose.xlu0.b32.cont [9/16] 0.0, 128
      %2084 = vxpose.xlu0.b32.cont [10/16] 0.0, 128
      %2085 = vxpose.xlu0.b32.cont [11/16] 0.0, 128
      %2086 = vxpose.xlu0.b32.cont [12/16] 0.0, 128
      %2087 = vxpose.xlu0.b32.cont [13/16] 0.0, 128
      %2088 = vxpose.xlu0.b32.cont [14/16] 0.0, 128
      %2089 = vxpose.xlu0.b32.cont [15/16] 0.0, 128
      %2090 = vxpose.xlu0.b32.end [16/16] 0.0, 128
      %v2091 = vpop.trf.xlu0
      %v2092 = vpop.trf.xlu0
      %v2093 = vpop.trf.xlu0
      %v2094 = vpop.trf.xlu0
      %v2095 = vpop.trf.xlu0
      %v2096 = vpop.trf.xlu0
      %v2097 = vpop.trf.xlu0
      %v2098 = vpop.trf.xlu0
      %v2099 = vpop.trf.xlu0
      %v2100 = vpop.trf.xlu0
      %v2101 = vpop.trf.xlu0
      %v2102 = vpop.trf.xlu0
      %v2103 = vpop.trf.xlu0
      %v2104 = vpop.trf.xlu0
      %v2105 = vpop.trf.xlu0
      %v2106 = vpop.trf.xlu0
      %2107 = vset.pattern.permute.xlu0 0
      %2108 = vperm.xlu0 %2107, %v2049
      %v2109 = vpop.permute.xlu0 %2108
      %2111 = vset.pattern.permute.xlu0 0
      %2112 = vperm.xlu0 %2111, %v2054
      %v2113 = vpop.permute.xlu0 %2112
      %v2115 = vlaneseq
      %v2116 = vshrl.u32 %v2115, 7
      %v2117 = vsub.s32 0, %v2116
      %v2118 = vrot.slane %v2091, %v2117
      %v2119 = vadd.f32 %v2109, %v2118
      %v2120 = vadd.f32 %v2113, %v2118
      %vm2121 = vcmp.ge.f32.partialorder %v2119, 0.0
      %vm2122 = vcmp.ge.f32.partialorder %v2120, 0.0
      %v2123 = vmul.f32 %v2119, 0.2
      %v2124 = vmul.f32 %v2120, 0.2
      %v2125 = vsel %vm2121, %v2119, %v2123
      %v2126 = vsel %vm2122, %v2120, %v2124
      %v2127 = vsub.f32 0.0, %v2125
      %v2128 = vsub.f32 0.0, %v2126
      %v2129 = vmul.f32 %v2127, 1.442695
      %v2130 = vpow.pop %v2129
      %v2131 = vmul.f32 %v2128, 1.442695
      %v2132 = vpow.pop %v2131
      %v2133 = vsel %vm671, %v2130, 0.0
      %v2134 = vsel %vm672, %v2132, 0.0
      %v2135 = vsel %vm686, %v2133, 0.0
      %2136 = vadd.xlane.f32.xlu0 %v2135
      %v2137 = vpop.xlane.xlu0 %2136
      %v2138 = vsel %vm686, %v2134, 0.0
      %2139 = vadd.xlane.f32.xlu0 %v2138
      %v2140 = vpop.xlane.xlu0 %2139
      %v2141 = vadd.f32 %v2137, 9e-15
      %v2142 = vadd.f32 %v2140, 9e-15
      %v2143 = vrcp.pop %v2141
      %v2144 = vrcp.pop %v2142
      %v2146 = vsel %vm686, %v2133, 0
      %v2149 = vsel %vm686, %v2134, 0
      %2151 = vmatprep.subr.mxu0 0.0
      %2152 = vmatpush1.msra.mxu0 %v1957
      %2153 = vmatprep.subr.mxu0 0.0
      %2154 = vmatpush1.msra.mxu0 %v1958
      %2155 = vmatprep.subr.mxu0 0.0
      %2156 = vmatpush1.msra.mxu0 0.0
      %2157 = vmatprep.subr.mxu0 0.0
      %2158 = vmatpush1.msra.mxu0 0.0
      %2159 = vmatprep.subr.mxu0 0.0
      %2160 = vmatpush1.msra.mxu0 0.0
      %2161 = vmatprep.subr.mxu0 0.0
      %2162 = vmatpush1.msra.mxu0 0.0
      %2163 = vmatprep.subr.mxu0 0.0
      %2164 = vmatpush1.msra.mxu0 0.0
      %2165 = vmatprep.subr.mxu0 0.0
      %2166 = vmatpush1.msra.mxu0 0.0
      %2167 = vmatprep.subr.mxu0 0.0
      %2168 = vmatpush1.msra.mxu0 0.0
      %2169 = vmatprep.subr.mxu0 0.0
      %2170 = vmatpush1.msra.mxu0 0.0
      %2171 = vmatprep.subr.mxu0 0.0
      %2172 = vmatpush1.msra.mxu0 0.0
      %2173 = vmatprep.subr.mxu0 0.0
      %2174 = vmatpush1.msra.mxu0 0.0
      %2175 = vmatprep.subr.mxu0 0.0
      %2176 = vmatpush1.msra.mxu0 0.0
      %2177 = vmatprep.subr.mxu0 0.0
      %2178 = vmatpush1.msra.mxu0 0.0
      %2179 = vmatprep.subr.mxu0 0.0
      %2180 = vmatpush1.msra.mxu0 0.0
      %2181 = vmatprep.subr.mxu0 0.0
      %2182 = vmatpush1.msra.mxu0 0.0
      %2183 = vmatprep.subr.mxu0 0.0
      %2184 = vmatpush1.msra.mxu0 0.0
      %2185 = vmatprep.subr.mxu0 0.0
      %2186 = vmatpush1.msra.mxu0 0.0
      %2187 = vmatprep.subr.mxu0 0.0
      %2188 = vmatpush1.msra.mxu0 0.0
      %2189 = vmatprep.subr.mxu0 0.0
      %2190 = vmatpush1.msra.mxu0 0.0
      %2191 = vmatprep.subr.mxu0 0.0
      %2192 = vmatpush1.msra.mxu0 0.0
      %2193 = vmatprep.subr.mxu0 0.0
      %2194 = vmatpush1.msra.mxu0 0.0
      %2195 = vmatprep.subr.mxu0 0.0
      %2196 = vmatpush1.msra.mxu0 0.0
      %2197 = vmatprep.subr.mxu0 0.0
      %2198 = vmatpush1.msra.mxu0 0.0
      %2199 = vmatprep.subr.mxu0 0.0
      %2200 = vmatpush1.msra.mxu0 0.0
      %2201 = vmatprep.subr.mxu0 0.0
      %2202 = vmatpush1.msra.mxu0 0.0
      %2203 = vmatprep.subr.mxu0 0.0
      %2204 = vmatpush1.msra.mxu0 0.0
      %2205 = vmatprep.subr.mxu0 0.0
      %2206 = vmatpush1.msra.mxu0 0.0
      %2207 = vmatprep.subr.mxu0 0.0
      %2208 = vmatpush1.msra.mxu0 0.0
      %2209 = vmatprep.subr.mxu0 0.0
      %2210 = vmatpush1.msra.mxu0 0.0
      %2211 = vmatprep.subr.mxu0 0.0
      %2212 = vmatpush1.msra.mxu0 0.0
      %2213 = vmatprep.subr.mxu0 0.0
      %2214 = vmatpush1.msra.mxu0 0.0
      %2215 = vmatprep.mubr.f32.mxu0 0.0
      %2216 = vmatmul.mubr.f32.gmra.mrb[0].mxu0 %v2146
      %v2217 = vpop.f32.mrb[0].mxu0
      %v2218 = vadd.f32 0.0, %v2217
      %v2219 = vpop.f32.mrb[0].mxu0
      %2220 = vmatprep.mubr.f32.mxu0 0.0
      %2221 = vmatmul.mubr.f32.gmra.mrb[0].mxu0 %v2149
      %v2222 = vpop.f32.mrb[0].mxu0
      %v2223 = vadd.f32 0.0, %v2222
      %v2224 = vpop.f32.mrb[0].mxu0
      %2225 = vdwg.mxu0
      %v2226 = vmul.f32 %v2218, %v2143
      %v2227 = vmul.f32 %v2223, %v2144
      %2230 = vrot.lane.b32.xlu0 %v1931, 120
      %v2231 = vpop.permute.xlu0 %2230
      %2232 = vrot.lane.b32.xlu0 %v1936, 120
      %v2233 = vpop.permute.xlu0 %2232
      %v2236 = vadd.f32 %v2226, %v2231
      %v2237 = vadd.f32 %v2227, %v2233
      %vm2238 = vcmp.ge.f32.partialorder %v2236, 0.0
      %vm2239 = vcmp.ge.f32.partialorder %v2237, 0.0
      %v2240 = vmul.f32 %v2236, 0.2
      %v2241 = vmul.f32 %v2237, 0.2
      %v2242 = vsel %vm2238, %v2236, %v2240
      %v2243 = vsel %vm2239, %v2237, %v2241
      %2246 = vrot.lane.b32.xlu0 %v2059, 127
      %v2247 = vpop.permute.xlu0 %2246
      %2248 = vrot.lane.b32.xlu0 %v2064, 127
      %v2249 = vpop.permute.xlu0 %2248
      %2252 = vxpose.xlu0.b32.start [1/16] %v2247, 128
      %2253 = vxpose.xlu0.b32.cont [2/16] %v2249, 128
      %2254 = vxpose.xlu0.b32.cont [3/16] 0.0, 128
      %2255 = vxpose.xlu0.b32.cont [4/16] 0.0, 128
      %2256 = vxpose.xlu0.b32.cont [5/16] 0.0, 128
      %2257 = vxpose.xlu0.b32.cont [6/16] 0.0, 128
      %2258 = vxpose.xlu0.b32.cont [7/16] 0.0, 128
      %2259 = vxpose.xlu0.b32.cont [8/16] 0.0, 128
      %2260 = vxpose.xlu0.b32.cont [9/16] 0.0, 128
      %2261 = vxpose.xlu0.b32.cont [10/16] 0.0, 128
      %2262 = vxpose.xlu0.b32.cont [11/16] 0.0, 128
      %2263 = vxpose.xlu0.b32.cont [12/16] 0.0, 128
      %2264 = vxpose.xlu0.b32.cont [13/16] 0.0, 128
      %2265 = vxpose.xlu0.b32.cont [14/16] 0.0, 128
      %2266 = vxpose.xlu0.b32.cont [15/16] 0.0, 128
      %2267 = vxpose.xlu0.b32.end [16/16] 0.0, 128
      %v2268 = vpop.trf.xlu0
      %v2269 = vpop.trf.xlu0
      %v2270 = vpop.trf.xlu0
      %v2271 = vpop.trf.xlu0
      %v2272 = vpop.trf.xlu0
      %v2273 = vpop.trf.xlu0
      %v2274 = vpop.trf.xlu0
      %v2275 = vpop.trf.xlu0
      %v2276 = vpop.trf.xlu0
      %v2277 = vpop.trf.xlu0
      %v2278 = vpop.trf.xlu0
      %v2279 = vpop.trf.xlu0
      %v2280 = vpop.trf.xlu0
      %v2281 = vpop.trf.xlu0
      %v2282 = vpop.trf.xlu0
      %v2283 = vpop.trf.xlu0
      %2284 = vset.pattern.permute.xlu0 0
      %2285 = vperm.xlu0 %2284, %v2059
      %v2286 = vpop.permute.xlu0 %2285
      %2288 = vset.pattern.permute.xlu0 0
      %2289 = vperm.xlu0 %2288, %v2064
      %v2290 = vpop.permute.xlu0 %2289
      %v2292 = vlaneseq
      %v2293 = vshrl.u32 %v2292, 7
      %v2294 = vsub.s32 0, %v2293
      %v2295 = vrot.slane %v2268, %v2294
      %v2296 = vadd.f32 %v2286, %v2295
      %v2297 = vadd.f32 %v2290, %v2295
      %vm2298 = vcmp.ge.f32.partialorder %v2296, 0.0
      %vm2299 = vcmp.ge.f32.partialorder %v2297, 0.0
      %v2300 = vmul.f32 %v2296, 0.2
      %v2301 = vmul.f32 %v2297, 0.2
      %v2302 = vsel %vm2298, %v2296, %v2300
      %v2303 = vsel %vm2299, %v2297, %v2301
      %v2304 = vsub.f32 0.0, %v2302
      %v2305 = vsub.f32 0.0, %v2303
      %v2306 = vmul.f32 %v2304, 1.442695
      %v2307 = vpow.pop %v2306
      %v2308 = vmul.f32 %v2305, 1.442695
      %v2309 = vpow.pop %v2308
      %v2310 = vsel %vm671, %v2307, 0.0
      %v2311 = vsel %vm672, %v2309, 0.0
      %v2312 = vsel %vm686, %v2310, 0.0
      %2313 = vadd.xlane.f32.xlu0 %v2312
      %v2314 = vpop.xlane.xlu0 %2313
      %v2315 = vsel %vm686, %v2311, 0.0
      %2316 = vadd.xlane.f32.xlu0 %v2315
      %v2317 = vpop.xlane.xlu0 %2316
      %v2318 = vadd.f32 %v2314, 9e-15
      %v2319 = vadd.f32 %v2317, 9e-15
      %v2320 = vrcp.pop %v2318
      %v2321 = vrcp.pop %v2319
      %v2323 = vsel %vm686, %v2310, 0
      %v2326 = vsel %vm686, %v2311, 0
      %2328 = vmatprep.subr.mxu0 0.0
      %2329 = vmatpush1.msra.mxu0 %v1959
      %2330 = vmatprep.subr.mxu0 0.0
      %2331 = vmatpush1.msra.mxu0 %v1960
      %2332 = vmatprep.subr.mxu0 0.0
      %2333 = vmatpush1.msra.mxu0 0.0
      %2334 = vmatprep.subr.mxu0 0.0
      %2335 = vmatpush1.msra.mxu0 0.0
      %2336 = vmatprep.subr.mxu0 0.0
      %2337 = vmatpush1.msra.mxu0 0.0
      %2338 = vmatprep.subr.mxu0 0.0
      %2339 = vmatpush1.msra.mxu0 0.0
      %2340 = vmatprep.subr.mxu0 0.0
      %2341 = vmatpush1.msra.mxu0 0.0
      %2342 = vmatprep.subr.mxu0 0.0
      %2343 = vmatpush1.msra.mxu0 0.0
      %2344 = vmatprep.subr.mxu0 0.0
      %2345 = vmatpush1.msra.mxu0 0.0
      %2346 = vmatprep.subr.mxu0 0.0
      %2347 = vmatpush1.msra.mxu0 0.0
      %2348 = vmatprep.subr.mxu0 0.0
      %2349 = vmatpush1.msra.mxu0 0.0
      %2350 = vmatprep.subr.mxu0 0.0
      %2351 = vmatpush1.msra.mxu0 0.0
      %2352 = vmatprep.subr.mxu0 0.0
      %2353 = vmatpush1.msra.mxu0 0.0
      %2354 = vmatprep.subr.mxu0 0.0
      %2355 = vmatpush1.msra.mxu0 0.0
      %2356 = vmatprep.subr.mxu0 0.0
      %2357 = vmatpush1.msra.mxu0 0.0
      %2358 = vmatprep.subr.mxu0 0.0
      %2359 = vmatpush1.msra.mxu0 0.0
      %2360 = vmatprep.subr.mxu0 0.0
      %2361 = vmatpush1.msra.mxu0 0.0
      %2362 = vmatprep.subr.mxu0 0.0
      %2363 = vmatpush1.msra.mxu0 0.0
      %2364 = vmatprep.subr.mxu0 0.0
      %2365 = vmatpush1.msra.mxu0 0.0
      %2366 = vmatprep.subr.mxu0 0.0
      %2367 = vmatpush1.msra.mxu0 0.0
      %2368 = vmatprep.subr.mxu0 0.0
      %2369 = vmatpush1.msra.mxu0 0.0
      %2370 = vmatprep.subr.mxu0 0.0
      %2371 = vmatpush1.msra.mxu0 0.0
      %2372 = vmatprep.subr.mxu0 0.0
      %2373 = vmatpush1.msra.mxu0 0.0
      %2374 = vmatprep.subr.mxu0 0.0
      %2375 = vmatpush1.msra.mxu0 0.0
      %2376 = vmatprep.subr.mxu0 0.0
      %2377 = vmatpush1.msra.mxu0 0.0
      %2378 = vmatprep.subr.mxu0 0.0
      %2379 = vmatpush1.msra.mxu0 0.0
      %2380 = vmatprep.subr.mxu0 0.0
      %2381 = vmatpush1.msra.mxu0 0.0
      %2382 = vmatprep.subr.mxu0 0.0
      %2383 = vmatpush1.msra.mxu0 0.0
      %2384 = vmatprep.subr.mxu0 0.0
      %2385 = vmatpush1.msra.mxu0 0.0
      %2386 = vmatprep.subr.mxu0 0.0
      %2387 = vmatpush1.msra.mxu0 0.0
      %2388 = vmatprep.subr.mxu0 0.0
      %2389 = vmatpush1.msra.mxu0 0.0
      %2390 = vmatprep.subr.mxu0 0.0
      %2391 = vmatpush1.msra.mxu0 0.0
      %2392 = vmatprep.mubr.f32.mxu0 0.0
      %2393 = vmatmul.mubr.f32.gmra.mrb[0].mxu0 %v2323
      %v2394 = vpop.f32.mrb[0].mxu0
      %v2395 = vadd.f32 0.0, %v2394
      %v2396 = vpop.f32.mrb[0].mxu0
      %2397 = vmatprep.mubr.f32.mxu0 0.0
      %2398 = vmatmul.mubr.f32.gmra.mrb[0].mxu0 %v2326
      %v2399 = vpop.f32.mrb[0].mxu0
      %v2400 = vadd.f32 0.0, %v2399
      %v2401 = vpop.f32.mrb[0].mxu0
      %2402 = vdwg.mxu0
      %v2403 = vmul.f32 %v2395, %v2320
      %v2404 = vmul.f32 %v2400, %v2321
      %2407 = vrot.lane.b32.xlu0 %v1941, 120
      %v2408 = vpop.permute.xlu0 %2407
      %2409 = vrot.lane.b32.xlu0 %v1946, 120
      %v2410 = vpop.permute.xlu0 %2409
      %v2413 = vadd.f32 %v2403, %v2408
      %v2414 = vadd.f32 %v2404, %v2410
      %vm2415 = vcmp.ge.f32.partialorder %v2413, 0.0
      %vm2416 = vcmp.ge.f32.partialorder %v2414, 0.0
      %v2417 = vmul.f32 %v2413, 0.2
      %v2418 = vmul.f32 %v2414, 0.2
      %v2419 = vsel %vm2415, %v2413, %v2417
      %v2420 = vsel %vm2416, %v2414, %v2418
      %2421 = vst.msk [vmem:[%s668] sm:$0xff] %vm1969, %v2242
      %2422 = vst.msk [vmem:[%s668 + $0x8] sm:$0xff] %vm1969, %v2243
      %2423 = vst.msk [vmem:[%s668 + $0x10] sm:$0xff] %vm1969, %v2419
      %2424 = vst.msk [vmem:[%s668 + $0x18] sm:$0xff] %vm1969, %v2420
      %p2425 = scmp.lt.s32.totalorder %s25, 2
      %s2426 = scalar_select %p2425, %s25, 2
      %s2427 = smul.addr %s2426, 4
      %s2428 = smul.addr %s2427, 8
      %s2429 = scalar_lea.vmem %s14, %s2428
      // Predicated region
      $region77: #{gat_forward.1} parent=75 // pred_check
        %p2430 = pneg %p402
      $region78: #{gat_forward.1} parent=75 // pred_check_branch
        %2432 = sbr.rel (%p2430) target = $region80
      $region79: #{gat_forward.1} parent=75 // pred_region
        _
      $region80: #{gat_forward.1} parent=75 // pred_fallthru
        _
    $region76: #{gat_forward.1} parent=5 // pred_fallthru
      _
    %p2433 = scmp.le.s32.totalorder 2, %s20
    // Predicated region
    $region81: #{gat_forward.1} parent=5 // pred_check
      %p2434 = pneg %p2433
    $region82: #{gat_forward.1} parent=5 // pred_check_branch
      %2436 = sbr.rel (%p2434) target = $region84
    $region83: #{gat_forward.1} parent=5 // pred_region
      %s2437 = ssub.s32 %s20, 2
      // Predicated region
      $region85: #{gat_forward.1} parent=83 // pred_check
        %p2438 = pneg %p408
      $region86: #{gat_forward.1} parent=83 // pred_check_branch
        %2440 = sbr.rel (%p2438) target = $region88
      $region87: #{gat_forward.1} parent=83 // pred_region
        %p2441 = scmp.lt.s32.totalorder %s26, 2
        %s2442 = scalar_select %p2441, %s26, 2
        %s2443 = smul.addr %s2442, 4
        %s2444 = smul.addr %s2443, 8
        %s2445 = scalar_lea.vmem %s14, %s2444
      $region88: #{gat_forward.1} parent=83 // pred_fallthru
        _
    $region84: #{gat_forward.1} parent=5 // pred_fallthru
      _
  $region6: #{gat_forward.1} parent=0 // loop_footer
    %s24 = sadd.s32 1, %s20
  $region7: #{gat_forward.1} parent=0 // loop_footer_branch
    %19 = sbr.rel target = $region3
  $region8: #{gat_forward.1} parent=0 // loop_exit
    _

</llo_original>
